<compile_context>
chip_gen: v5e
topology: v5e:2x2
jax: 0.10.0
libtpu: 0.0.40
codegen_flags: <defaults>
</compile_context>

<pallas_src>
import functools
import math

import jax
import jax.numpy as jnp
from jax.experimental import pallas as pl
from jax.experimental.pallas import tpu as pltpu

_LANE = 128      # vreg lane width: last-dim tiling granularity
_SUBLANE = 8     # vreg sublane count: second-to-last-dim granularity

# Single-buffering for blocks whose index_map is constant across the grid
# (halves their VMEM footprint).  Reset to None (default double-buffering) by
# the probe in __main__ if this jax/libtpu build rejects buffer_count=1.
try:
    _CONST_PIPELINE_MODE = pl.Buffered(1)
except Exception:  # pragma: no cover
    _CONST_PIPELINE_MODE = None


def _round_up(x, m):
    return (x + m - 1) // m * m


def _pad2d(a, rows, cols):
    r, c = a.shape
    if r == rows and c == cols:
        return a
    return jnp.pad(a, ((0, rows - r), (0, cols - c)))


# ---------------------------------------------------------------------------
# Linear:  y = x @ w + b      (Q/K/V/O projections; weights VMEM-resident)
# ---------------------------------------------------------------------------
def _linear_kernel(x_ref, w_ref, b_ref, o_ref):
    y = jnp.dot(x_ref[...], w_ref[...], preferred_element_type=jnp.float32)
    o_ref[...] = (y + b_ref[...]).astype(o_ref.dtype)


def linear(x2d, w, b, *, block_m=512):
    M, d_in = x2d.shape
    d_out = w.shape[1]
    d_in_p = _round_up(d_in, _LANE)
    d_out_p = _round_up(d_out, _LANE)
    bm = _round_up(min(block_m, _round_up(M, _SUBLANE)), _SUBLANE)
    m_p = _round_up(M, bm)

    x_p = _pad2d(x2d, m_p, d_in_p)
    w_p = _pad2d(w, d_in_p, d_out_p)
    b_p = _pad2d(b.reshape(1, d_out), 1, d_out_p)

    nbytes = jnp.dtype(x2d.dtype).itemsize
    vmem_need = (2 * bm * d_in_p                  # x  (double buffered)
                 + d_in_p * d_out_p + d_out_p     # w, b (single buffered)
                 + 2 * bm * d_out_p) * nbytes     # out (double buffered)
    vmem_limit = int(min(max(vmem_need * 3 // 2 + (2 << 20), 32 << 20), 64 << 20))
    cost = pl.CostEstimate(
        flops=2 * m_p * d_in_p * d_out_p,
        transcendentals=0,
        bytes_accessed=(m_p * d_in_p + d_in_p * d_out_p + m_p * d_out_p) * nbytes)

    out = pl.pallas_call(
        _linear_kernel,
        out_shape=jax.ShapeDtypeStruct((m_p, d_out_p), x2d.dtype),
        grid_spec=pltpu.PrefetchScalarGridSpec(
            num_scalar_prefetch=0,
            grid=(m_p // bm,),
            in_specs=[
                pl.BlockSpec((bm, d_in_p), lambda i: (i, 0)),
                pl.BlockSpec((d_in_p, d_out_p), lambda i: (0, 0),
                             pipeline_mode=_CONST_PIPELINE_MODE),
                pl.BlockSpec((1, d_out_p), lambda i: (0, 0),
                             pipeline_mode=_CONST_PIPELINE_MODE),
            ],
            out_specs=pl.BlockSpec((bm, d_out_p), lambda i: (i, 0)),
        ),
        compiler_params=pltpu.CompilerParams(
            dimension_semantics=("parallel",),
            vmem_limit_bytes=vmem_limit),
        cost_estimate=cost,
    )(x_p, w_p, b_p)
    return out[:M, :d_out]


# ---------------------------------------------------------------------------
# PositionWiseFFN:  y = relu(x @ w1 + b1) @ w2 + b2
# grid = (rows/block_m ["parallel"], d_hid/block_h ["arbitrary", innermost])
# ---------------------------------------------------------------------------
def _ffn_kernel(x_ref, w1_ref, b1_ref, w2_ref, b2_ref, o_ref, acc_ref):
    k = pl.program_id(1)

    @pl.when(k == 0)
    def _init():
        acc_ref[...] = jnp.zeros_like(acc_ref)

    h = jnp.dot(x_ref[...], w1_ref[...], preferred_element_type=jnp.float32)
    h = jnp.maximum(h + b1_ref[...], 0.0)                 # ReLU per hid tile (exact)
    acc_ref[...] += jnp.dot(h.astype(w2_ref.dtype), w2_ref[...],
                            preferred_element_type=jnp.float32)

    @pl.when(k == pl.num_programs(1) - 1)
    def _finalize():
        o_ref[...] = (acc_ref[...] + b2_ref[...]).astype(o_ref.dtype)


def position_wise_ffn(x, w1, b1, w2, b2, *, block_m=512, block_h=512):
    """x: (..., d_in); w1: (d_in, d_hid); w2: (d_hid, d_out) -> (..., d_out)."""
    lead = x.shape[:-1]
    d_in = x.shape[-1]
    d_hid = w1.shape[1]
    d_out = w2.shape[1]
    M = 1
    for s in lead:
        M *= s
    x2d = x.reshape(M, d_in)

    # Lane-dense feature padding and full row tiles (no clamped remainder).
    d_in_p = _round_up(d_in, _LANE)
    d_out_p = _round_up(d_out, _LANE)
    bm = _round_up(min(block_m, _round_up(M, _SUBLANE)), _SUBLANE)
    bh = _round_up(min(block_h, _round_up(d_hid, _LANE)), _LANE)
    m_p = _round_up(M, bm)
    d_hid_p = _round_up(d_hid, bh)
    hid_steps = d_hid_p // bh

    x_p = _pad2d(x2d, m_p, d_in_p)
    w1_p = _pad2d(w1, d_in_p, d_hid_p)
    b1_p = _pad2d(b1.reshape(1, d_hid), 1, d_hid_p)
    w2_p = _pad2d(w2, d_hid_p, d_out_p)
    b2_p = _pad2d(b2.reshape(1, d_out), 1, d_out_p)

    nbytes = jnp.dtype(x.dtype).itemsize
    # Weight tiles only need double-buffering when they change (>1 hid step).
    wbuf = 1 if hid_steps == 1 else 2
    w_mode = _CONST_PIPELINE_MODE if hid_steps == 1 else None
    vmem_need = ((2 * bm * d_in_p
                  + wbuf * (d_in_p * bh + bh + bh * d_out_p) + d_out_p
                  + 2 * bm * d_out_p) * nbytes
                 + bm * d_out_p * 4)                       # f32 accumulator
    vmem_limit = int(min(max(vmem_need * 3 // 2 + (2 << 20), 32 << 20), 64 << 20))
    cost = pl.CostEstimate(
        flops=2 * m_p * d_in_p * d_hid_p + 2 * m_p * d_hid_p * d_out_p,
        transcendentals=0,
        bytes_accessed=(m_p * d_in_p + d_in_p * d_hid_p + d_hid_p * d_out_p
                        + d_hid_p + d_out_p + m_p * d_out_p) * nbytes)

    out = pl.pallas_call(
        _ffn_kernel,
        out_shape=jax.ShapeDtypeStruct((m_p, d_out_p), x.dtype),
        grid_spec=pltpu.PrefetchScalarGridSpec(
            num_scalar_prefetch=0,
            grid=(m_p // bm, hid_steps),
            in_specs=[
                pl.BlockSpec((bm, d_in_p), lambda i, k: (i, 0)),
                pl.BlockSpec((d_in_p, bh), lambda i, k: (0, k), pipeline_mode=w_mode),
                pl.BlockSpec((1, bh), lambda i, k: (0, k), pipeline_mode=w_mode),
                pl.BlockSpec((bh, d_out_p), lambda i, k: (k, 0), pipeline_mode=w_mode),
                pl.BlockSpec((1, d_out_p), lambda i, k: (0, 0),
                             pipeline_mode=_CONST_PIPELINE_MODE),
            ],
            out_specs=pl.BlockSpec((bm, d_out_p), lambda i, k: (i, 0)),
            scratch_shapes=[pltpu.VMEM((bm, d_out_p), jnp.float32)],
        ),
        compiler_params=pltpu.CompilerParams(
            dimension_semantics=("parallel", "arbitrary"),
            vmem_limit_bytes=vmem_limit),
        cost_estimate=cost,
    )(x_p, w1_p, b1_p, w2_p, b2_p)

    return out[:M, :d_out].reshape(lead + (d_out,))


# ---------------------------------------------------------------------------
# Scaled dot-product attention: one (batch, head) pair per grid step.
# The additive -1e9 bias reproduces torch's masked_fill(mask==0, -1e9).
# ---------------------------------------------------------------------------
def _attention_kernel(q_ref, k_ref, v_ref, bias_ref, o_ref, *, scale):
    q = q_ref[0].astype(jnp.float32)
    k = k_ref[0].astype(jnp.float32)
    v = v_ref[0]
    s = jax.lax.dot_general(q, k, (((1,), (1,)), ((), ())),
                            preferred_element_type=jnp.float32)
    s = s * scale + bias_ref[0]
    m = jnp.max(s, axis=-1, keepdims=True)
    p = jnp.exp(s - m)
    p = p / jnp.sum(p, axis=-1, keepdims=True)
    o = jnp.dot(p.astype(v.dtype), v, preferred_element_type=jnp.float32)
    o_ref[...] = o[None].astype(o_ref.dtype)


def _scaled_dot_attention(q, k, v, bias, *, scale):
    G, Sq, dk = q.shape
    Sk = k.shape[1]
    kern = functools.partial(_attention_kernel, scale=scale)
    return pl.pallas_call(
        kern,
        out_shape=jax.ShapeDtypeStruct((G, Sq, dk), q.dtype),
        grid_spec=pltpu.PrefetchScalarGridSpec(
            num_scalar_prefetch=0,
            grid=(G,),
            in_specs=[
                pl.BlockSpec((1, Sq, dk), lambda g: (g, 0, 0)),
                pl.BlockSpec((1, Sk, dk), lambda g: (g, 0, 0)),
                pl.BlockSpec((1, Sk, dk), lambda g: (g, 0, 0)),
                pl.BlockSpec((1, Sq, Sk), lambda g: (g, 0, 0)),
            ],
            out_specs=pl.BlockSpec((1, Sq, dk), lambda g: (g, 0, 0)),
        ),
        compiler_params=pltpu.CompilerParams(
            dimension_semantics=("parallel",)),
    )(q, k, v, bias)


def multi_head_attention(x_q, x_k, x_v, p, mask, num_heads):
    B, Sq, d_model = x_q.shape
    Sk = x_k.shape[1]
    H = num_heads
    d_k = d_model // H

    def proj(x, S, w, b):
        y = linear(x.reshape(B * S, d_model), w, b)
        return y.reshape(B, S, H, d_k).transpose(0, 2, 1, 3).reshape(B * H, S, d_k)

    q = proj(x_q, Sq, p["wq"], p["bq"])
    k = proj(x_k, Sk, p["wk"], p["bk"])
    v = proj(x_v, Sk, p["wv"], p["bv"])

    if mask is None:
        bias = jnp.zeros((B * H, Sq, Sk), jnp.float32)
    else:
        m = jnp.broadcast_to(mask, (B, Sq, Sk))
        bias = jnp.where(m == 0, -1e9, 0.0).astype(jnp.float32)
        bias = jnp.broadcast_to(bias[:, None], (B, H, Sq, Sk)).reshape(B * H, Sq, Sk)

    attn = _scaled_dot_attention(q, k, v, bias, scale=1.0 / math.sqrt(d_k))
    attn = attn.reshape(B, H, Sq, d_k).transpose(0, 2, 1, 3).reshape(B * Sq, d_model)
    return linear(attn, p["wo"], p["bo"]).reshape(B, Sq, d_model)


# ---------------------------------------------------------------------------
# AddNorm:  LayerNorm(x + y) over the last axis (dropout = identity in eval).
# Mean / E[z^2] use the true feature count, so zero-padding is exact.
# ---------------------------------------------------------------------------
def _add_layernorm_kernel(x_ref, y_ref, g_ref, b_ref, o_ref, *, inv_d, eps):
    z = x_ref[...].astype(jnp.float32) + y_ref[...].astype(jnp.float32)
    mean = jnp.sum(z, axis=-1, keepdims=True) * inv_d
    var = jnp.sum(z * z, axis=-1, keepdims=True) * inv_d - mean * mean
    rstd = jax.lax.rsqrt(jnp.maximum(var, 0.0) + eps)
    o_ref[...] = ((z - mean) * rstd * g_ref[...] + b_ref[...]).astype(o_ref.dtype)


def add_layer_norm(x, y, gamma, beta, *, eps=1e-5, block_m=512):
    lead = x.shape[:-1]
    d = x.shape[-1]
    M = 1
    for s in lead:
        M *= s
    x2d = x.reshape(M, d)
    y2d = y.reshape(M, d)

    d_p = _round_up(d, _LANE)
    bm = _round_up(min(block_m, _round_up(M, _SUBLANE)), _SUBLANE)
    m_p = _round_up(M, bm)

    x_p = _pad2d(x2d, m_p, d_p)
    y_p = _pad2d(y2d, m_p, d_p)
    g_p = _pad2d(gamma.reshape(1, d), 1, d_p)
    b_p = _pad2d(beta.reshape(1, d), 1, d_p)

    kern = functools.partial(_add_layernorm_kernel, inv_d=1.0 / d, eps=eps)
    out = pl.pallas_call(
        kern,
        out_shape=jax.ShapeDtypeStruct((m_p, d_p), x.dtype),
        grid_spec=pltpu.PrefetchScalarGridSpec(
            num_scalar_prefetch=0,
            grid=(m_p // bm,),
            in_specs=[
                pl.BlockSpec((bm, d_p), lambda i: (i, 0)),
                pl.BlockSpec((bm, d_p), lambda i: (i, 0)),
                pl.BlockSpec((1, d_p), lambda i: (0, 0),
                             pipeline_mode=_CONST_PIPELINE_MODE),
                pl.BlockSpec((1, d_p), lambda i: (0, 0),
                             pipeline_mode=_CONST_PIPELINE_MODE),
            ],
            out_specs=pl.BlockSpec((bm, d_p), lambda i: (i, 0)),
        ),
        compiler_params=pltpu.CompilerParams(
            dimension_semantics=("parallel",)),
    )(x_p, y_p, g_p, b_p)
    return out[:M, :d].reshape(lead + (d,))


# ---------------------------------------------------------------------------
# decoderlayer forward
# ---------------------------------------------------------------------------
def decoder_layer(x, kv_memory, params, *, num_heads, src_mask=None, tgt_mask=None):
    """Forward pass of the torch `decoderlayer` (eval mode)."""
    # TODO(synk): dropout omitted (identity in eval mode); training-mode dropout
    # would need a PRNG-seeded mask inside each kernel.
    m = kv_memory
    x2 = multi_head_attention(x, x, x, params["attn1"], tgt_mask, num_heads)
    x2 = add_layer_norm(x, x2, params["ln1_g"], params["ln1_b"])
    x3 = multi_head_attention(x2, m, m, params["attn2"], src_mask, num_heads)
    # NB: the reference torch code computes addnorm2(x3, x3) (not (x2, x3)); kept as-is.
    z = add_layer_norm(x3, x3, params["ln2_g"], params["ln2_b"])
    y = position_wise_ffn(z, params["w1"], params["b1"], params["w2"], params["b2"])
    return add_layer_norm(z, y, params["ln3_g"], params["ln3_b"])


# ---------------------------------------------------------------------------
# Parameter init (deterministic, nn.Linear-style; weights stored as (in, out))
# ---------------------------------------------------------------------------
def _init_linear(key, d_in, d_out, dtype=jnp.float32):
    kw, kb = jax.random.split(key)
    bound = 1.0 / math.sqrt(d_in)
    w = jax.random.uniform(kw, (d_in, d_out), dtype, -bound, bound)
    b = jax.random.uniform(kb, (d_out,), dtype, -bound, bound)
    return w, b


def init_decoder_params(key, d_model, fnn_size, dtype=jnp.float32):
    ks = jax.random.split(key, 16)

    def attn_params(k4):
        p = {}
        for name, kk in zip(("q", "k", "v", "o"), k4):
            w, b = _init_linear(kk, d_model, d_model, dtype)
            p["w" + name] = w
            p["b" + name] = b
        return p

    def ln_params(k):
        kg, kb = jax.random.split(k)
        return (1.0 + 0.1 * jax.random.normal(kg, (d_model,), dtype),
                0.1 * jax.random.normal(kb, (d_model,), dtype))

    params = {"attn1": attn_params(ks[0:4]), "attn2": attn_params(ks[4:8])}
    params["ln1_g"], params["ln1_b"] = ln_params(ks[8])
    params["ln2_g"], params["ln2_b"] = ln_params(ks[9])
    params["ln3_g"], params["ln3_b"] = ln_params(ks[10])
    params["w1"], params["b1"] = _init_linear(ks[11], d_model, fnn_size, dtype)
    params["w2"], params["b2"] = _init_linear(ks[12], fnn_size, d_model, dtype)
    return params


# ---------------------------------------------------------------------------
# Pure-JAX reference
# ---------------------------------------------------------------------------
def _ref_mha(xq, xk, xv, p, mask, num_heads):
    B, Sq, d = xq.shape
    Sk = xk.shape[1]
    H = num_heads
    dk = d // H

    def split(x, S, w, b):
        return (x @ w + b).reshape(B, S, H, dk).transpose(0, 2, 1, 3)

    q = split(xq, Sq, p["wq"], p["bq"])
    k = split(xk, Sk, p["wk"], p["bk"])
    v = split(xv, Sk, p["wv"], p["bv"])
    s = jnp.einsum("bhqd,bhkd->bhqk", q, k) / math.sqrt(dk)
    if mask is not None:
        mm = jnp.broadcast_to(mask, (B, Sq, Sk))[:, None]
        s = s + jnp.where(mm == 0, -1e9, 0.0)
    a = jax.nn.softmax(s, axis=-1)
    o = jnp.einsum("bhqk,bhkd->bhqd", a, v).transpose(0, 2, 1, 3).reshape(B, Sq, d)
    return o @ p["wo"] + p["bo"]


def _ref_add_ln(x, y, g, b, eps=1e-5):
    z = x + y
    mu = z.mean(-1, keepdims=True)
    var = ((z - mu) ** 2).mean(-1, keepdims=True)
    return (z - mu) / jnp.sqrt(var + eps) * g + b


def _ref_ffn(x, w1, b1, w2, b2):
    return jnp.maximum(x @ w1 + b1, 0.0) @ w2 + b2


def ref_decoder_layer(x, kv_memory, p, num_heads, src_mask, tgt_mask):
    x2 = _ref_mha(x, x, x, p["attn1"], tgt_mask, num_heads)
    x2 = _ref_add_ln(x, x2, p["ln1_g"], p["ln1_b"])
    x3 = _ref_mha(x2, kv_memory, kv_memory, p["attn2"], src_mask, num_heads)
    z = _ref_add_ln(x3, x3, p["ln2_g"], p["ln2_b"])
    return _ref_add_ln(z, _ref_ffn(z, p["w1"], p["b1"], p["w2"], p["b2"]),
                       p["ln3_g"], p["ln3_b"])


if __name__ == "__main__":
    # Probe single-buffered constant blocks; fall back to default double
    # buffering if this build rejects pipeline_mode=pl.Buffered(1).
    try:
        _probe = linear(jnp.ones((8, 32), jnp.float32),
                        jnp.ones((32, 32), jnp.float32),
                        jnp.zeros((32,), jnp.float32))
        jax.block_until_ready(_probe)
    except Exception:
        _CONST_PIPELINE_MODE = None

    key = jax.random.PRNGKey(0)
    k_x, k_m, k_p, k_f, k_w = jax.random.split(key, 5)

    # ---- full decoder layer at toy shapes matching the torch module ---------
    batch, seq, d_model, num_heads, fnn_size = 2, 8, 32, 4, 64
    x = jax.random.normal(k_x, (batch, seq, d_model), jnp.float32)
    kv_memory = jax.random.normal(k_m, (batch, seq, d_model), jnp.float32)
    params = init_decoder_params(k_p, d_model, fnn_size)

    # causal target mask (1 = attend, 0 = masked); src_mask left as None
    tgt_mask = jnp.broadcast_to(
        jnp.tril(jnp.ones((seq, seq), jnp.int32))[None], (batch, seq, seq))

    fwd = jax.jit(functools.partial(decoder_layer, num_heads=num_heads))
    out = fwd(x, kv_memory, params, src_mask=None, tgt_mask=tgt_mask)
    jax.block_until_ready(out)
    assert out.shape == (batch, seq, d_model)

    ref = ref_decoder_layer(x, kv_memory, params, num_heads, None, tgt_mask)
    assert jnp.allclose(out, ref, atol=1e-2, rtol=1e-2), (
        "decoder mismatch, max abs err = %e" % float(jnp.max(jnp.abs(out - ref))))

    # ---- standalone FFN kernel at tile-exercising shapes; sweep block_m -----
    Bf, Sf, d_in_f, d_hid_f = 8, 256, 256, 1024
    xf = jax.random.normal(k_f, (Bf, Sf, d_in_f), jnp.float32)
    w1f, b1f = _init_linear(jax.random.fold_in(k_w, 0), d_in_f, d_hid_f)
    w2f, b2f = _init_linear(jax.random.fold_in(k_w, 1), d_hid_f, d_in_f)
    ref_f = _ref_ffn(xf.reshape(-1, d_in_f), w1f, b1f, w2f, b2f).reshape(Bf, Sf, d_in_f)

    ffn_jit = jax.jit(position_wise_ffn, static_argnames=("block_m", "block_h"))
    for bm in (256, 512):
        out_f = ffn_jit(xf, w1f, b1f, w2f, b2f, block_m=bm, block_h=512)
        jax.block_until_ready(out_f)
        assert jnp.allclose(out_f, ref_f, atol=1e-2, rtol=1e-2)

    print("KERNEL_OK")
</pallas_src>

<mosaic_0001>
module attributes {stable_mosaic.version = 11 : i64} {
  func.func @_linear_kernel(%arg0: i32, %arg1: memref<8x128xf32, #tpu.memory_space<vmem>>, %arg2: memref<128x128xf32, #tpu.memory_space<vmem>>, %arg3: memref<1x128xf32, #tpu.memory_space<vmem>>, %arg4: memref<8x128xf32, #tpu.memory_space<vmem>>) attributes {dimension_semantics = [#tpu.dimension_semantics<parallel>], iteration_bounds = array<i64: 1>, scalar_prefetch = 0 : i64, scratch_operands = 0 : i64, tpu.core_type = #tpu.core_type<tc>, window_params = [{transform_indices = @transform_0, window_bounds = array<i64: 8, 128>}, {pipeline_mode = #tpu.pipeline_mode<synchronous>, transform_indices = @transform_1, window_bounds = array<i64: 128, 128>}, {pipeline_mode = #tpu.pipeline_mode<synchronous>, transform_indices = @transform_2, window_bounds = array<i64: 1, 128>}, {transform_indices = @transform_3, window_bounds = array<i64: 8, 128>}]} {
    %c0 = arith.constant 0 : index
    %c0_0 = arith.constant 0 : index
    %0 = vector.load %arg1[%c0, %c0_0] : memref<8x128xf32, #tpu.memory_space<vmem>>, vector<8x128xf32>
    %c0_1 = arith.constant 0 : index
    %c0_2 = arith.constant 0 : index
    %1 = vector.load %arg2[%c0_1, %c0_2] : memref<128x128xf32, #tpu.memory_space<vmem>>, vector<128x128xf32>
    %cst = arith.constant dense<0.000000e+00> : vector<8x128xf32>
    %2 = tpu.matmul %0, %1, %cst {dimension_numbers = #tpu.dot_dimension_numbers<[1], [0], [0], [1], [0, 0, 1, 1], [], []>} : vector<8x128xf32>, vector<128x128xf32>, vector<8x128xf32> -> vector<8x128xf32>
    %c0_3 = arith.constant 0 : index
    %c0_4 = arith.constant 0 : index
    %3 = vector.load %arg3[%c0_3, %c0_4] : memref<1x128xf32, #tpu.memory_space<vmem>>, vector<1x128xf32>
    %4 = vector.broadcast %3 : vector<1x128xf32> to vector<8x128xf32>
    %5 = arith.addf %2, %4 : vector<8x128xf32>
    %c0_5 = arith.constant 0 : index
    %c0_6 = arith.constant 0 : index
    %6 = vector.load %arg4[%c0_5, %c0_6] : memref<8x128xf32, #tpu.memory_space<vmem>>, vector<8x128xf32>
    tpu.vector_store %arg4[%c0_5, %c0_6], %5 {strides = array<i32>} : memref<8x128xf32, #tpu.memory_space<vmem>>, vector<8x128xf32>,
    return
  }
  func.func @transform_0(%arg0: i32) -> (i32, i32) {
    %c0_i32 = arith.constant 0 : i32
    %c0_i32_0 = arith.constant 0 : i32
    return %arg0, %c0_i32 : i32, i32
  }
  func.func @transform_1(%arg0: i32) -> (i32, i32) {
    %c0_i32 = arith.constant 0 : i32
    %c0_i32_0 = arith.constant 0 : i32
    %c0_i32_1 = arith.constant 0 : i32
    return %c0_i32, %c0_i32_0 : i32, i32
  }
  func.func @transform_2(%arg0: i32) -> (i32, i32) {
    %c0_i32 = arith.constant 0 : i32
    %c0_i32_0 = arith.constant 0 : i32
    %c0_i32_1 = arith.constant 0 : i32
    return %c0_i32, %c0_i32_0 : i32, i32
  }
  func.func @transform_3(%arg0: i32) -> (i32, i32) {
    %c0_i32 = arith.constant 0 : i32
    %c0_i32_0 = arith.constant 0 : i32
    return %arg0, %c0_i32 : i32, i32
  }
}

module attributes {stable_mosaic.version = 11 : i64} {
  func.func @_attention_kernel(%arg0: i32, %arg1: memref<1x8x8xf32, #tpu.memory_space<vmem>>, %arg2: memref<1x8x8xf32, #tpu.memory_space<vmem>>, %arg3: memref<1x8x8xf32, #tpu.memory_space<vmem>>, %arg4: memref<1x8x8xf32, #tpu.memory_space<vmem>>, %arg5: memref<1x8x8xf32, #tpu.memory_space<vmem>>) attributes {dimension_semantics = [#tpu.dimension_semantics<parallel>], iteration_bounds = array<i64: 8>, scalar_prefetch = 0 : i64, scratch_operands = 0 : i64, tpu.core_type = #tpu.core_type<tc>, window_params = [{transform_indices = @transform_0, window_bounds = array<i64: 1, 8, 8>}, {transform_indices = @transform_1, window_bounds = array<i64: 1, 8, 8>}, {transform_indices = @transform_2, window_bounds = array<i64: 1, 8, 8>}, {transform_indices = @transform_3, window_bounds = array<i64: 1, 8, 8>}, {transform_indices = @transform_4, window_bounds = array<i64: 1, 8, 8>}]} {
    %c0 = arith.constant 0 : index
    %c0_0 = arith.constant 0 : index
    %c0_1 = arith.constant 0 : index
    %0 = vector.load %arg1[%c0, %c0_0, %c0_1] : memref<1x8x8xf32, #tpu.memory_space<vmem>>, vector<1x8x8xf32>
    %1 = vector.shape_cast %0 : vector<1x8x8xf32> to vector<8x8xf32>
    %c0_2 = arith.constant 0 : index
    %c0_3 = arith.constant 0 : index
    %c0_4 = arith.constant 0 : index
    %2 = vector.load %arg2[%c0_2, %c0_3, %c0_4] : memref<1x8x8xf32, #tpu.memory_space<vmem>>, vector<1x8x8xf32>
    %3 = vector.shape_cast %2 : vector<1x8x8xf32> to vector<8x8xf32>
    %c0_5 = arith.constant 0 : index
    %c0_6 = arith.constant 0 : index
    %c0_7 = arith.constant 0 : index
    %4 = vector.load %arg3[%c0_5, %c0_6, %c0_7] : memref<1x8x8xf32, #tpu.memory_space<vmem>>, vector<1x8x8xf32>
    %5 = vector.shape_cast %4 : vector<1x8x8xf32> to vector<8x8xf32>
    %cst = arith.constant dense<0.000000e+00> : vector<8x8xf32>
    %6 = tpu.matmul %1, %3, %cst {dimension_numbers = #tpu.dot_dimension_numbers<[1], [1], [0], [0], [0, 0, 1, 0], [], []>} : vector<8x8xf32>, vector<8x8xf32>, vector<8x8xf32> -> vector<8x8xf32>
    %cst_8 = arith.constant 0.353553385 : f32
    %7 = vector.broadcast %cst_8 : f32 to vector<8x8xf32>
    %8 = arith.mulf %6, %7 : vector<8x8xf32>
    %c0_9 = arith.constant 0 : index
    %c0_10 = arith.constant 0 : index
    %c0_11 = arith.constant 0 : index
    %9 = vector.load %arg4[%c0_9, %c0_10, %c0_11] : memref<1x8x8xf32, #tpu.memory_space<vmem>>, vector<1x8x8xf32>
    %10 = vector.shape_cast %9 : vector<1x8x8xf32> to vector<8x8xf32>
    %11 = arith.addf %8, %10 : vector<8x8xf32>
    %cst_12 = arith.constant dense<0xFF800000> : vector<8xf32>
    %12 = vector.multi_reduction <maximumf>, %11, %cst_12 [1] : vector<8x8xf32> to vector<8xf32>
    %13 = vector.shape_cast %12 : vector<8xf32> to vector<8x1xf32>
    %14 = vector.broadcast %13 : vector<8x1xf32> to vector<8x8xf32>
    %15 = arith.subf %11, %14 : vector<8x8xf32>
    %16 = math.exp %15 : vector<8x8xf32>
    %cst_13 = arith.constant dense<0.000000e+00> : vector<8xf32>
    %17 = vector.multi_reduction <add>, %16, %cst_13 [1] : vector<8x8xf32> to vector<8xf32>
    %18 = vector.shape_cast %17 : vector<8xf32> to vector<8x1xf32>
    %19 = vector.broadcast %18 : vector<8x1xf32> to vector<8x8xf32>
    %20 = arith.divf %16, %19 : vector<8x8xf32>
    %cst_14 = arith.constant dense<0.000000e+00> : vector<8x8xf32>
    %21 = tpu.matmul %20, %5, %cst_14 {dimension_numbers = #tpu.dot_dimension_numbers<[1], [0], [0], [1], [0, 0, 1, 1], [], []>} : vector<8x8xf32>, vector<8x8xf32>, vector<8x8xf32> -> vector<8x8xf32>
    %22 = vector.shape_cast %21 : vector<8x8xf32> to vector<1x8x8xf32>
    %c0_15 = arith.constant 0 : index
    %c0_16 = arith.constant 0 : index
    %c0_17 = arith.constant 0 : index
    %23 = vector.load %arg5[%c0_15, %c0_16, %c0_17] : memref<1x8x8xf32, #tpu.memory_space<vmem>>, vector<1x8x8xf32>
    tpu.vector_store %arg5[%c0_15, %c0_16, %c0_17], %22 {strides = array<i32>} : memref<1x8x8xf32, #tpu.memory_space<vmem>>, vector<1x8x8xf32>,
    return
  }
  func.func @transform_0(%arg0: i32) -> (i32, i32, i32) {
    %c0_i32 = arith.constant 0 : i32
    %c0_i32_0 = arith.constant 0 : i32
    %c0_i32_1 = arith.constant 0 : i32
    return %arg0, %c0_i32, %c0_i32_0 : i32, i32, i32
  }
  func.func @transform_1(%arg0: i32) -> (i32, i32, i32) {
    %c0_i32 = arith.constant 0 : i32
    %c0_i32_0 = arith.constant 0 : i32
    %c0_i32_1 = arith.constant 0 : i32
    return %arg0, %c0_i32, %c0_i32_0 : i32, i32, i32
  }
  func.func @transform_2(%arg0: i32) -> (i32, i32, i32) {
    %c0_i32 = arith.constant 0 : i32
    %c0_i32_0 = arith.constant 0 : i32
    %c0_i32_1 = arith.constant 0 : i32
    return %arg0, %c0_i32, %c0_i32_0 : i32, i32, i32
  }
  func.func @transform_3(%arg0: i32) -> (i32, i32, i32) {
    %c0_i32 = arith.constant 0 : i32
    %c0_i32_0 = arith.constant 0 : i32
    %c0_i32_1 = arith.constant 0 : i32
    return %arg0, %c0_i32, %c0_i32_0 : i32, i32, i32
  }
  func.func @transform_4(%arg0: i32) -> (i32, i32, i32) {
    %c0_i32 = arith.constant 0 : i32
    %c0_i32_0 = arith.constant 0 : i32
    %c0_i32_1 = arith.constant 0 : i32
    return %arg0, %c0_i32, %c0_i32_0 : i32, i32, i32
  }
}

module attributes {stable_mosaic.version = 11 : i64} {
  func.func @_linear_kernel(%arg0: i32, %arg1: memref<16x128xf32, #tpu.memory_space<vmem>>, %arg2: memref<128x128xf32, #tpu.memory_space<vmem>>, %arg3: memref<1x128xf32, #tpu.memory_space<vmem>>, %arg4: memref<16x128xf32, #tpu.memory_space<vmem>>) attributes {dimension_semantics = [#tpu.dimension_semantics<parallel>], iteration_bounds = array<i64: 1>, scalar_prefetch = 0 : i64, scratch_operands = 0 : i64, tpu.core_type = #tpu.core_type<tc>, window_params = [{transform_indices = @transform_0, window_bounds = array<i64: 16, 128>}, {pipeline_mode = #tpu.pipeline_mode<synchronous>, transform_indices = @transform_1, window_bounds = array<i64: 128, 128>}, {pipeline_mode = #tpu.pipeline_mode<synchronous>, transform_indices = @transform_2, window_bounds = array<i64: 1, 128>}, {transform_indices = @transform_3, window_bounds = array<i64: 16, 128>}]} {
    %c0 = arith.constant 0 : index
    %c0_0 = arith.constant 0 : index
    %0 = vector.load %arg1[%c0, %c0_0] : memref<16x128xf32, #tpu.memory_space<vmem>>, vector<16x128xf32>
    %c0_1 = arith.constant 0 : index
    %c0_2 = arith.constant 0 : index
    %1 = vector.load %arg2[%c0_1, %c0_2] : memref<128x128xf32, #tpu.memory_space<vmem>>, vector<128x128xf32>
    %cst = arith.constant dense<0.000000e+00> : vector<16x128xf32>
    %2 = tpu.matmul %0, %1, %cst {dimension_numbers = #tpu.dot_dimension_numbers<[1], [0], [0], [1], [0, 0, 1, 1], [], []>} : vector<16x128xf32>, vector<128x128xf32>, vector<16x128xf32> -> vector<16x128xf32>
    %c0_3 = arith.constant 0 : index
    %c0_4 = arith.constant 0 : index
    %3 = vector.load %arg3[%c0_3, %c0_4] : memref<1x128xf32, #tpu.memory_space<vmem>>, vector<1x128xf32>
    %4 = vector.broadcast %3 : vector<1x128xf32> to vector<16x128xf32>
    %5 = arith.addf %2, %4 : vector<16x128xf32>
    %c0_5 = arith.constant 0 : index
    %c0_6 = arith.constant 0 : index
    %6 = vector.load %arg4[%c0_5, %c0_6] : memref<16x128xf32, #tpu.memory_space<vmem>>, vector<16x128xf32>
    tpu.vector_store %arg4[%c0_5, %c0_6], %5 {strides = array<i32>} : memref<16x128xf32, #tpu.memory_space<vmem>>, vector<16x128xf32>,
    return
  }
  func.func @transform_0(%arg0: i32) -> (i32, i32) {
    %c0_i32 = arith.constant 0 : i32
    %c0_i32_0 = arith.constant 0 : i32
    return %arg0, %c0_i32 : i32, i32
  }
  func.func @transform_1(%arg0: i32) -> (i32, i32) {
    %c0_i32 = arith.constant 0 : i32
    %c0_i32_0 = arith.constant 0 : i32
    %c0_i32_1 = arith.constant 0 : i32
    return %c0_i32, %c0_i32_0 : i32, i32
  }
  func.func @transform_2(%arg0: i32) -> (i32, i32) {
    %c0_i32 = arith.constant 0 : i32
    %c0_i32_0 = arith.constant 0 : i32
    %c0_i32_1 = arith.constant 0 : i32
    return %c0_i32, %c0_i32_0 : i32, i32
  }
  func.func @transform_3(%arg0: i32) -> (i32, i32) {
    %c0_i32 = arith.constant 0 : i32
    %c0_i32_0 = arith.constant 0 : i32
    return %arg0, %c0_i32 : i32, i32
  }
}

module attributes {stable_mosaic.version = 11 : i64} {
  func.func @_add_layernorm_kernel(%arg0: i32, %arg1: memref<16x128xf32, #tpu.memory_space<vmem>>, %arg2: memref<16x128xf32, #tpu.memory_space<vmem>>, %arg3: memref<1x128xf32, #tpu.memory_space<vmem>>, %arg4: memref<1x128xf32, #tpu.memory_space<vmem>>, %arg5: memref<16x128xf32, #tpu.memory_space<vmem>>) attributes {dimension_semantics = [#tpu.dimension_semantics<parallel>], iteration_bounds = array<i64: 1>, scalar_prefetch = 0 : i64, scratch_operands = 0 : i64, tpu.core_type = #tpu.core_type<tc>, window_params = [{transform_indices = @transform_0, window_bounds = array<i64: 16, 128>}, {transform_indices = @transform_1, window_bounds = array<i64: 16, 128>}, {pipeline_mode = #tpu.pipeline_mode<synchronous>, transform_indices = @transform_2, window_bounds = array<i64: 1, 128>}, {pipeline_mode = #tpu.pipeline_mode<synchronous>, transform_indices = @transform_3, window_bounds = array<i64: 1, 128>}, {transform_indices = @transform_4, window_bounds = array<i64: 16, 128>}]} {
    %c0 = arith.constant 0 : index
    %c0_0 = arith.constant 0 : index
    %0 = vector.load %arg1[%c0, %c0_0] : memref<16x128xf32, #tpu.memory_space<vmem>>, vector<16x128xf32>
    %c0_1 = arith.constant 0 : index
    %c0_2 = arith.constant 0 : index
    %1 = vector.load %arg2[%c0_1, %c0_2] : memref<16x128xf32, #tpu.memory_space<vmem>>, vector<16x128xf32>
    %2 = arith.addf %0, %1 : vector<16x128xf32>
    %cst = arith.constant dense<0.000000e+00> : vector<16xf32>
    %3 = vector.multi_reduction <add>, %2, %cst [1] : vector<16x128xf32> to vector<16xf32>
    %4 = vector.shape_cast %3 : vector<16xf32> to vector<16x1xf32>
    %cst_3 = arith.constant 3.125000e-02 : f32
    %5 = vector.broadcast %cst_3 : f32 to vector<16x1xf32>
    %6 = arith.mulf %4, %5 : vector<16x1xf32>
    %7 = arith.mulf %2, %2 : vector<16x128xf32>
    %cst_4 = arith.constant dense<0.000000e+00> : vector<16xf32>
    %8 = vector.multi_reduction <add>, %7, %cst_4 [1] : vector<16x128xf32> to vector<16xf32>
    %9 = vector.shape_cast %8 : vector<16xf32> to vector<16x1xf32>
    %cst_5 = arith.constant 3.125000e-02 : f32
    %10 = vector.broadcast %cst_5 : f32 to vector<16x1xf32>
    %11 = arith.mulf %9, %10 : vector<16x1xf32>
    %12 = arith.mulf %6, %6 : vector<16x1xf32>
    %13 = arith.subf %11, %12 : vector<16x1xf32>
    %cst_6 = arith.constant 0.000000e+00 : f32
    %14 = vector.broadcast %cst_6 : f32 to vector<16x1xf32>
    %15 = arith.maximumf %13, %14 : vector<16x1xf32>
    %cst_7 = arith.constant 9.99999974E-6 : f32
    %16 = vector.broadcast %cst_7 : f32 to vector<16x1xf32>
    %17 = arith.addf %15, %16 : vector<16x1xf32>
    %18 = math.rsqrt %17 : vector<16x1xf32>
    %19 = vector.broadcast %6 : vector<16x1xf32> to vector<16x128xf32>
    %20 = arith.subf %2, %19 : vector<16x128xf32>
    %21 = vector.broadcast %18 : vector<16x1xf32> to vector<16x128xf32>
    %22 = arith.mulf %20, %21 : vector<16x128xf32>
    %c0_8 = arith.constant 0 : index
    %c0_9 = arith.constant 0 : index
    %23 = vector.load %arg3[%c0_8, %c0_9] : memref<1x128xf32, #tpu.memory_space<vmem>>, vector<1x128xf32>
    %24 = vector.broadcast %23 : vector<1x128xf32> to vector<16x128xf32>
    %25 = arith.mulf %22, %24 : vector<16x128xf32>
    %c0_10 = arith.constant 0 : index
    %c0_11 = arith.constant 0 : index
    %26 = vector.load %arg4[%c0_10, %c0_11] : memref<1x128xf32, #tpu.memory_space<vmem>>, vector<1x128xf32>
    %27 = vector.broadcast %26 : vector<1x128xf32> to vector<16x128xf32>
    %28 = arith.addf %25, %27 : vector<16x128xf32>
    %c0_12 = arith.constant 0 : index
    %c0_13 = arith.constant 0 : index
    %29 = vector.load %arg5[%c0_12, %c0_13] : memref<16x128xf32, #tpu.memory_space<vmem>>, vector<16x128xf32>
    tpu.vector_store %arg5[%c0_12, %c0_13], %28 {strides = array<i32>} : memref<16x128xf32, #tpu.memory_space<vmem>>, vector<16x128xf32>,
    return
  }
  func.func @transform_0(%arg0: i32) -> (i32, i32) {
    %c0_i32 = arith.constant 0 : i32
    %c0_i32_0 = arith.constant 0 : i32
    return %arg0, %c0_i32 : i32, i32
  }
  func.func @transform_1(%arg0: i32) -> (i32, i32) {
    %c0_i32 = arith.constant 0 : i32
    %c0_i32_0 = arith.constant 0 : i32
    return %arg0, %c0_i32 : i32, i32
  }
  func.func @transform_2(%arg0: i32) -> (i32, i32) {
    %c0_i32 = arith.constant 0 : i32
    %c0_i32_0 = arith.constant 0 : i32
    %c0_i32_1 = arith.constant 0 : i32
    return %c0_i32, %c0_i32_0 : i32, i32
  }
  func.func @transform_3(%arg0: i32) -> (i32, i32) {
    %c0_i32 = arith.constant 0 : i32
    %c0_i32_0 = arith.constant 0 : i32
    %c0_i32_1 = arith.constant 0 : i32
    return %c0_i32, %c0_i32_0 : i32, i32
  }
  func.func @transform_4(%arg0: i32) -> (i32, i32) {
    %c0_i32 = arith.constant 0 : i32
    %c0_i32_0 = arith.constant 0 : i32
    return %arg0, %c0_i32 : i32, i32
  }
}

module attributes {stable_mosaic.version = 11 : i64} {
  func.func @_ffn_kernel(%arg0: i32, %arg1: i32, %arg2: memref<16x128xf32, #tpu.memory_space<vmem>>, %arg3: memref<128x128xf32, #tpu.memory_space<vmem>>, %arg4: memref<1x128xf32, #tpu.memory_space<vmem>>, %arg5: memref<128x128xf32, #tpu.memory_space<vmem>>, %arg6: memref<1x128xf32, #tpu.memory_space<vmem>>, %arg7: memref<16x128xf32, #tpu.memory_space<vmem>>, %arg8: memref<16x128xf32, #tpu.memory_space<vmem>>) attributes {dimension_semantics = [#tpu.dimension_semantics<parallel>, #tpu.dimension_semantics<arbitrary>], iteration_bounds = array<i64: 1, 1>, scalar_prefetch = 0 : i64, scratch_operands = 1 : i64, tpu.core_type = #tpu.core_type<tc>, window_params = [{transform_indices = @transform_0, window_bounds = array<i64: 16, 128>}, {transform_indices = @transform_1, window_bounds = array<i64: 128, 128>}, {transform_indices = @transform_2, window_bounds = array<i64: 1, 128>}, {transform_indices = @transform_3, window_bounds = array<i64: 128, 128>}, {pipeline_mode = #tpu.pipeline_mode<synchronous>, transform_indices = @transform_4, window_bounds = array<i64: 1, 128>}, {transform_indices = @transform_5, window_bounds = array<i64: 16, 128>}]} {
    %c0_i32 = arith.constant 0 : i32
    %0 = arith.cmpi eq, %arg1, %c0_i32 : i32
    %1 = arith.extui %0 : i1 to i32
    %c0_i32_0 = arith.constant 0 : i32
    %2 = arith.cmpi ne, %1, %c0_i32_0 : i32
    scf.if %2 {
      %cst_16 = arith.constant 0.000000e+00 : f32
      %19 = vector.broadcast %cst_16 : f32 to vector<16x128xf32>
      %c0_17 = arith.constant 0 : index
      %c0_18 = arith.constant 0 : index
      %20 = vector.load %arg8[%c0_17, %c0_18] : memref<16x128xf32, #tpu.memory_space<vmem>>, vector<16x128xf32>
      tpu.vector_store %arg8[%c0_17, %c0_18], %19 {strides = array<i32>} : memref<16x128xf32, #tpu.memory_space<vmem>>, vector<16x128xf32>,
    } else {
    }
    %c0 = arith.constant 0 : index
    %c0_1 = arith.constant 0 : index
    %3 = vector.load %arg2[%c0, %c0_1] : memref<16x128xf32, #tpu.memory_space<vmem>>, vector<16x128xf32>
    %c0_2 = arith.constant 0 : index
    %c0_3 = arith.constant 0 : index
    %4 = vector.load %arg3[%c0_2, %c0_3] : memref<128x128xf32, #tpu.memory_space<vmem>>, vector<128x128xf32>
    %cst = arith.constant dense<0.000000e+00> : vector<16x128xf32>
    %5 = tpu.matmul %3, %4, %cst {dimension_numbers = #tpu.dot_dimension_numbers<[1], [0], [0], [1], [0, 0, 1, 1], [], []>} : vector<16x128xf32>, vector<128x128xf32>, vector<16x128xf32> -> vector<16x128xf32>
    %c0_4 = arith.constant 0 : index
    %c0_5 = arith.constant 0 : index
    %6 = vector.load %arg4[%c0_4, %c0_5] : memref<1x128xf32, #tpu.memory_space<vmem>>, vector<1x128xf32>
    %7 = vector.broadcast %6 : vector<1x128xf32> to vector<16x128xf32>
    %8 = arith.addf %5, %7 : vector<16x128xf32>
    %cst_6 = arith.constant 0.000000e+00 : f32
    %9 = vector.broadcast %cst_6 : f32 to vector<16x128xf32>
    %10 = arith.maximumf %8, %9 : vector<16x128xf32>
    %c0_7 = arith.constant 0 : index
    %c0_8 = arith.constant 0 : index
    %11 = vector.load %arg8[%c0_7, %c0_8] : memref<16x128xf32, #tpu.memory_space<vmem>>, vector<16x128xf32>
    %c0_9 = arith.constant 0 : index
    %c0_10 = arith.constant 0 : index
    %12 = vector.load %arg5[%c0_9, %c0_10] : memref<128x128xf32, #tpu.memory_space<vmem>>, vector<128x128xf32>
    %cst_11 = arith.constant dense<0.000000e+00> : vector<16x128xf32>
    %13 = tpu.matmul %10, %12, %cst_11 {dimension_numbers = #tpu.dot_dimension_numbers<[1], [0], [0], [1], [0, 0, 1, 1], [], []>} : vector<16x128xf32>, vector<128x128xf32>, vector<16x128xf32> -> vector<16x128xf32>
    %14 = arith.addf %11, %13 : vector<16x128xf32>
    %c0_12 = arith.constant 0 : index
    %c0_13 = arith.constant 0 : index
    %15 = vector.load %arg8[%c0_12, %c0_13] : memref<16x128xf32, #tpu.memory_space<vmem>>, vector<16x128xf32>
    tpu.vector_store %arg8[%c0_12, %c0_13], %14 {strides = array<i32>} : memref<16x128xf32, #tpu.memory_space<vmem>>, vector<16x128xf32>,
    %c0_i32_14 = arith.constant 0 : i32
    %16 = arith.cmpi eq, %arg1, %c0_i32_14 : i32
    %17 = arith.extui %16 : i1 to i32
    %c0_i32_15 = arith.constant 0 : i32
    %18 = arith.cmpi ne, %17, %c0_i32_15 : i32
    scf.if %18 {
      %c0_16 = arith.constant 0 : index
      %c0_17 = arith.constant 0 : index
      %19 = vector.load %arg8[%c0_16, %c0_17] : memref<16x128xf32, #tpu.memory_space<vmem>>, vector<16x128xf32>
      %c0_18 = arith.constant 0 : index
      %c0_19 = arith.constant 0 : index
      %20 = vector.load %arg6[%c0_18, %c0_19] : memref<1x128xf32, #tpu.memory_space<vmem>>, vector<1x128xf32>
      %21 = vector.broadcast %20 : vector<1x128xf32> to vector<16x128xf32>
      %22 = arith.addf %19, %21 : vector<16x128xf32>
      %c0_20 = arith.constant 0 : index
      %c0_21 = arith.constant 0 : index
      %23 = vector.load %arg7[%c0_20, %c0_21] : memref<16x128xf32, #tpu.memory_space<vmem>>, vector<16x128xf32>
      tpu.vector_store %arg7[%c0_20, %c0_21], %22 {strides = array<i32>} : memref<16x128xf32, #tpu.memory_space<vmem>>, vector<16x128xf32>,
    } else {
    }
    return
  }
  func.func @transform_0(%arg0: i32, %arg1: i32) -> (i32, i32) {
    %c0_i32 = arith.constant 0 : i32
    %c0_i32_0 = arith.constant 0 : i32
    return %arg0, %c0_i32 : i32, i32
  }
  func.func @transform_1(%arg0: i32, %arg1: i32) -> (i32, i32) {
    %c0_i32 = arith.constant 0 : i32
    %c0_i32_0 = arith.constant 0 : i32
    return %c0_i32, %arg1 : i32, i32
  }
  func.func @transform_2(%arg0: i32, %arg1: i32) -> (i32, i32) {
    %c0_i32 = arith.constant 0 : i32
    %c0_i32_0 = arith.constant 0 : i32
    return %c0_i32, %arg1 : i32, i32
  }
  func.func @transform_3(%arg0: i32, %arg1: i32) -> (i32, i32) {
    %c0_i32 = arith.constant 0 : i32
    %c0_i32_0 = arith.constant 0 : i32
    return %arg1, %c0_i32 : i32, i32
  }
  func.func @transform_4(%arg0: i32, %arg1: i32) -> (i32, i32) {
    %c0_i32 = arith.constant 0 : i32
    %c0_i32_0 = arith.constant 0 : i32
    %c0_i32_1 = arith.constant 0 : i32
    return %c0_i32, %c0_i32_0 : i32, i32
  }
  func.func @transform_5(%arg0: i32, %arg1: i32) -> (i32, i32) {
    %c0_i32 = arith.constant 0 : i32
    %c0_i32_0 = arith.constant 0 : i32
    return %arg0, %c0_i32 : i32, i32
  }
}

</mosaic_0001>

<llo_original>
// kernel: tpu_custom_call.1
$region0: #{tpu_custom_call.1}
  #allocation0 [shape = 'u32[]', space=smem, size = 0x4, offset = 0x4, fixed_abs, tag = 'smem constant byte address 0x4 - core index']
  #allocation1 [shape = 'u32[72,128]{1,0:T(1,128)}', space=vmem, size = 0x9000, scoped, tag = 'internal scratch']
  %s0 = inlined_call_operand.hbm [shape: f32[8,128], index: 0, kind: input, shape index: {}]
  %s1 = inlined_call_operand.hbm [shape: f32[128,128], index: 1, kind: input, shape index: {}]
  %s2 = inlined_call_operand.vmem [shape: f32[1,128], index: 2, kind: input, shape index: {}]
  %s3 = inlined_call_operand.hbm [shape: f32[8,128], index: 3, kind: output, shape index: {}]
  %s4 = sld [smem:[#allocation0]]
  $region30: #{tpu_custom_call.1} parent=0
    _
  %s6 = ssub.s32 1, %s4
  %s7 = scalar_select 0, %s6, %s4
  $region1: #{tpu_custom_call.1} parent=0
    #allocation2 [shape = 'u8[4096]{0}', space=vmem, size = 0x1000, scoped, tag = 'input window, operand 0, single buffered']
    #allocation3 [shape = 's32[1]{0}', space=sflag, size = 0x4, scoped, tag = 'scoped memory for tpu_custom_call.1']
    #allocation4 [shape = 's32[1]{0}', space=sflag, size = 0x4, scoped, tag = 'scoped memory for tpu_custom_call.1']
    #allocation5 [shape = 'u8[65536]{0}', space=vmem, size = 0x10000, scoped, tag = 'input window, operand 1, single buffered']
    #allocation6 [shape = 's32[1]{0}', space=sflag, size = 0x4, scoped, tag = 'scoped memory for tpu_custom_call.1']
    #allocation7 [shape = 'u8[4096]{0}', space=vmem, size = 0x1000, scoped, tag = 'output window, operand 0, single buffered']
    %8 = vsyncpa [#allocation3], 0
    %9 = vsyncpa [#allocation6], 0
    %10 = vsyncpa [#allocation4], 0
    // Predicated region
    $region2: #{tpu_custom_call.1} parent=1 // pred_check
      _
    $region3: #{tpu_custom_call.1} parent=1 // pred_check_branch
      %12 = sbr.rel (0) target = $region5
    $region4: #{tpu_custom_call.1} parent=1 // pred_region
      %14 = vsyncadd [#allocation3], 0
      %s16 = sshll.u32 %s0, 4
      %s17 = int_to_ptr.hbm [resolvable:$true] %s16
      %s18 = sshll.u32 [#allocation2], 4
      %s19 = int_to_ptr.vmem [resolvable:$true] %s18
      %21 = dma.hbm_to_vmem [thread:$0]  %s17, 128, %s19, [#allocation3]
    $region5: #{tpu_custom_call.1} parent=1 // pred_fallthru
      _
    // Predicated region
    $region6: #{tpu_custom_call.1} parent=1 // pred_check
      _
    $region7: #{tpu_custom_call.1} parent=1 // pred_check_branch
      %23 = sbr.rel (0) target = $region9
    $region8: #{tpu_custom_call.1} parent=1 // pred_region
      %25 = vsyncadd [#allocation6], 0
      %s26 = sshll.u32 %s1, 4
      %s27 = int_to_ptr.hbm [resolvable:$true] %s26
      %s28 = sshll.u32 [#allocation5], 4
      %s29 = int_to_ptr.vmem [resolvable:$true] %s28
      %34 = dma.hbm_to_vmem [thread:$0]  %s27, 2048, %s29, [#allocation6], 128, 128, 8
    $region9: #{tpu_custom_call.1} parent=1 // pred_fallthru
      _
    // Predicated region
    $region10: #{tpu_custom_call.1} parent=1 // pred_check
      _
    $region11: #{tpu_custom_call.1} parent=1 // pred_check_branch
      %36 = sbr.rel (0) target = $region13
    $region12: #{tpu_custom_call.1} parent=1 // pred_region
      _
    $region13: #{tpu_custom_call.1} parent=1 // pred_fallthru
      _
    // Predicated region
    $region14: #{tpu_custom_call.1} parent=1 // pred_check
      _
    $region15: #{tpu_custom_call.1} parent=1 // pred_check_branch
      %38 = sbr.rel (0) target = $region17
    $region16: #{tpu_custom_call.1} parent=1 // pred_region
      %40 = dma.done [#allocation3], 128
    $region17: #{tpu_custom_call.1} parent=1 // pred_fallthru
      _
    // Predicated region
    $region18: #{tpu_custom_call.1} parent=1 // pred_check
      _
    $region19: #{tpu_custom_call.1} parent=1 // pred_check_branch
      %42 = sbr.rel (0) target = $region21
    $region20: #{tpu_custom_call.1} parent=1 // pred_region
      %44 = dma.done [#allocation6], 2048
    $region21: #{tpu_custom_call.1} parent=1 // pred_fallthru
      _
    %v45 = vld [vmem:[#allocation2] sm:$0xff]
    %v46 = vld [vmem:[#allocation5] sm:$0xff]
    %v47 = vld [vmem:[#allocation5 + $0x8] sm:$0xff]
    %v48 = vld [vmem:[#allocation5 + $0x10] sm:$0xff]
    %v49 = vld [vmem:[#allocation5 + $0x18] sm:$0xff]
    %v50 = vld [vmem:[#allocation5 + $0x20] sm:$0xff]
    %v51 = vld [vmem:[#allocation5 + $0x28] sm:$0xff]
    %v52 = vld [vmem:[#allocation5 + $0x30] sm:$0xff]
    %v53 = vld [vmem:[#allocation5 + $0x38] sm:$0xff]
    %v54 = vld [vmem:[#allocation5 + $0x40] sm:$0xff]
    %v55 = vld [vmem:[#allocation5 + $0x48] sm:$0xff]
    %v56 = vld [vmem:[#allocation5 + $0x50] sm:$0xff]
    %v57 = vld [vmem:[#allocation5 + $0x58] sm:$0xff]
    %v58 = vld [vmem:[#allocation5 + $0x60] sm:$0xff]
    %v59 = vld [vmem:[#allocation5 + $0x68] sm:$0xff]
    %v60 = vld [vmem:[#allocation5 + $0x70] sm:$0xff]
    %v61 = vld [vmem:[#allocation5 + $0x78] sm:$0xff]
    %v62 = vld [vmem:[%s2] sm:$0x1]
    %v64 = vperm.slane %v62, 0
    %66 = vmatpush.msra.mxu0 %v61
    %67 = vmatpush.msra.mxu0 %v60
    %68 = vmatpush.msra.mxu0 %v59
    %69 = vmatpush.msra.mxu0 %v58
    %70 = vmatpush.msra.mxu0 %v57
    %71 = vmatpush.msra.mxu0 %v56
    %72 = vmatpush.msra.mxu0 %v55
    %73 = vmatpush.msra.mxu0 %v54
    %74 = vmatpush.msra.mxu0 %v53
    %75 = vmatpush.msra.mxu0 %v52
    %76 = vmatpush.msra.mxu0 %v51
    %77 = vmatpush.msra.mxu0 %v50
    %78 = vmatpush.msra.mxu0 %v49
    %79 = vmatpush.msra.mxu0 %v48
    %80 = vmatpush.msra.mxu0 %v47
    %81 = vmatpush.msra.mxu0 %v46
    %82 = vmatmul.f32.gmra.mxu0 %v45
    %v83 = vpop.f32.mrf.mxu0
    %v84 = vadd.f32 %v64, %v83
    %85 = vdwg.mxu0
    %86 = vst [vmem:[#allocation7] sm:$0xff] %v84
    // Predicated region
    $region22: #{tpu_custom_call.1} parent=1 // pred_check
      _
    $region23: #{tpu_custom_call.1} parent=1 // pred_check_branch
      %88 = sbr.rel (0) target = $region25
    $region24: #{tpu_custom_call.1} parent=1 // pred_region
      %90 = vsyncadd [#allocation4], 0
      %s92 = sshll.u32 [#allocation7], 4
      %s93 = int_to_ptr.vmem [resolvable:$true] %s92
      %s94 = sshll.u32 %s3, 4
      %s95 = int_to_ptr.hbm [resolvable:$true] %s94
      %97 = dma.vmem_to_hbm [thread:$0]  %s93, 128, %s95, [#allocation4]
    $region25: #{tpu_custom_call.1} parent=1 // pred_fallthru
      _
    // Predicated region
    $region26: #{tpu_custom_call.1} parent=1 // pred_check
      _
    $region27: #{tpu_custom_call.1} parent=1 // pred_check_branch
      %99 = sbr.rel (0) target = $region29
    $region28: #{tpu_custom_call.1} parent=1 // pred_region
      %101 = dma.done [#allocation4], 128
    $region29: #{tpu_custom_call.1} parent=1 // pred_fallthru
      _
    %102 = vsyncpa [#allocation3], 1
    %103 = vsyncpa [#allocation6], 1
    %104 = vsyncpa [#allocation4], 1

// kernel: decoder_layer.17
$region0: #{decoder_layer.17}
  #allocation0 [shape = 'u32[]', space=smem, size = 0x4, offset = 0x4, fixed_abs, tag = 'smem constant byte address 0x4 - core index']
  #allocation1 [shape = 'u32[72,128]{1,0:T(1,128)}', space=vmem, size = 0x9000, scoped, tag = 'internal scratch']
  %s0 = inlined_call_operand.vmem [shape: f32[8,8,8], index: 0, kind: input, shape index: {}]
  %s1 = inlined_call_operand.vmem [shape: f32[8,8,8], index: 1, kind: input, shape index: {}]
  %s2 = inlined_call_operand.vmem [shape: f32[8,8,8], index: 2, kind: input, shape index: {}]
  %s3 = inlined_call_operand.vmem [shape: f32[8,8,8], index: 3, kind: input, shape index: {}]
  %s4 = inlined_call_operand.vmem [shape: f32[8,8,8], index: 4, kind: output, shape index: {}]
  %s5 = sld [smem:[#allocation0]]
  $region49: #{decoder_layer.17} parent=0
    _
  %s7 = ssub.s32 1, %s5
  %s8 = scalar_select 0, %s7, %s5
  loop: start=0, step=1, limit=10
  $region2: #{decoder_layer.17} parent=0 // loop_pre_header
    _
  $region3: #{decoder_layer.17} parent=0 // loop_header
    %s10 = sphi 0, %s14
    %p11 = scmp.ge.s32.totalorder %s10, 10
    %s20 = sphi 0, %s22
    %s23 = sphi 0, %s20
    %s24 = sphi 0, %s23
    %s40 = sphi 0, %s24
    %s46 = sphi 0, %s48
    %s49 = sphi 0, %s46
    %s50 = sphi 0, %s49
    %s66 = sphi 0, %s50
    %s72 = sphi 0, %s74
    %s75 = sphi 0, %s72
    %s76 = sphi 0, %s75
    %s92 = sphi 0, %s76
    %s98 = sphi 0, %s100
    %s101 = sphi 0, %s98
    %s102 = sphi 0, %s101
    %s118 = sphi 0, %s102
    %s124 = sphi 0, %s126
    %s127 = sphi 0, %s124
    %s128 = sphi 0, %s127
    %s144 = sphi 0, %s128
  $region4: #{decoder_layer.17} parent=0 // loop_header_branch
    %13 = sbr.rel (%p11) target = $region8
  $region5: #{decoder_layer.17} parent=0 // loop_body
    %s15 = ssub.s32 %s10, 1
    %s16 = ssub.s32 %s10, 2
    %s17 = sadd.s32 %s10, 1
    %s18 = ssub.s32 %s10, %s17
    %p19 = scmp.eq.s32.totalorder %s18, 0
    %s21 = sadd.s32 %s20, 1
    %s22 = scalar_select %p19, %s20, %s21
    %p25 = pneg %p19
    %p26 = scmp.eq.s32.totalorder %s10, 7
    %p27 = por %p25, %p26
    %p28 = scmp.ne.s32.totalorder %s20, %s23
    %p29 = scmp.eq.s32.totalorder %s10, 0
    %p30 = por %p28, %p29
    %p31 = scmp.ne.s32.totalorder %s20, %s23
    %p32 = scmp.eq.s32.totalorder %s15, 7
    %p33 = por %p31, %p32
    %p34 = scmp.ne.s32.totalorder %s23, %s24
    %p35 = scmp.eq.s32.totalorder %s15, 0
    %p36 = por %p34, %p35
    %p37 = scmp.ne.s32.totalorder %s23, %s24
    %p38 = scmp.eq.s32.totalorder %s16, 7
    %p39 = por %p37, %p38
    %p41 = scmp.ne.s32.totalorder %s24, %s40
    %p42 = scmp.eq.s32.totalorder %s16, 0
    %p43 = por %p41, %p42
    %s44 = ssub.s32 %s10, %s17
    %p45 = scmp.eq.s32.totalorder %s44, 0
    %s47 = sadd.s32 %s46, 1
    %s48 = scalar_select %p45, %s46, %s47
    %p51 = pneg %p45
    %p52 = scmp.eq.s32.totalorder %s10, 7
    %p53 = por %p51, %p52
    %p54 = scmp.ne.s32.totalorder %s46, %s49
    %p55 = scmp.eq.s32.totalorder %s10, 0
    %p56 = por %p54, %p55
    %p57 = scmp.ne.s32.totalorder %s46, %s49
    %p58 = scmp.eq.s32.totalorder %s15, 7
    %p59 = por %p57, %p58
    %p60 = scmp.ne.s32.totalorder %s49, %s50
    %p61 = scmp.eq.s32.totalorder %s15, 0
    %p62 = por %p60, %p61
    %p63 = scmp.ne.s32.totalorder %s49, %s50
    %p64 = scmp.eq.s32.totalorder %s16, 7
    %p65 = por %p63, %p64
    %p67 = scmp.ne.s32.totalorder %s50, %s66
    %p68 = scmp.eq.s32.totalorder %s16, 0
    %p69 = por %p67, %p68
    %s70 = ssub.s32 %s10, %s17
    %p71 = scmp.eq.s32.totalorder %s70, 0
    %s73 = sadd.s32 %s72, 1
    %s74 = scalar_select %p71, %s72, %s73
    %p77 = pneg %p71
    %p78 = scmp.eq.s32.totalorder %s10, 7
    %p79 = por %p77, %p78
    %p80 = scmp.ne.s32.totalorder %s72, %s75
    %p81 = scmp.eq.s32.totalorder %s10, 0
    %p82 = por %p80, %p81
    %p83 = scmp.ne.s32.totalorder %s72, %s75
    %p84 = scmp.eq.s32.totalorder %s15, 7
    %p85 = por %p83, %p84
    %p86 = scmp.ne.s32.totalorder %s75, %s76
    %p87 = scmp.eq.s32.totalorder %s15, 0
    %p88 = por %p86, %p87
    %p89 = scmp.ne.s32.totalorder %s75, %s76
    %p90 = scmp.eq.s32.totalorder %s16, 7
    %p91 = por %p89, %p90
    %p93 = scmp.ne.s32.totalorder %s76, %s92
    %p94 = scmp.eq.s32.totalorder %s16, 0
    %p95 = por %p93, %p94
    %s96 = ssub.s32 %s10, %s17
    %p97 = scmp.eq.s32.totalorder %s96, 0
    %s99 = sadd.s32 %s98, 1
    %s100 = scalar_select %p97, %s98, %s99
    %p103 = pneg %p97
    %p104 = scmp.eq.s32.totalorder %s10, 7
    %p105 = por %p103, %p104
    %p106 = scmp.ne.s32.totalorder %s98, %s101
    %p107 = scmp.eq.s32.totalorder %s10, 0
    %p108 = por %p106, %p107
    %p109 = scmp.ne.s32.totalorder %s98, %s101
    %p110 = scmp.eq.s32.totalorder %s15, 7
    %p111 = por %p109, %p110
    %p112 = scmp.ne.s32.totalorder %s101, %s102
    %p113 = scmp.eq.s32.totalorder %s15, 0
    %p114 = por %p112, %p113
    %p115 = scmp.ne.s32.totalorder %s101, %s102
    %p116 = scmp.eq.s32.totalorder %s16, 7
    %p117 = por %p115, %p116
    %p119 = scmp.ne.s32.totalorder %s102, %s118
    %p120 = scmp.eq.s32.totalorder %s16, 0
    %p121 = por %p119, %p120
    %s122 = ssub.s32 %s10, %s17
    %p123 = scmp.eq.s32.totalorder %s122, 0
    %s125 = sadd.s32 %s124, 1
    %s126 = scalar_select %p123, %s124, %s125
    %p129 = pneg %p123
    %p130 = scmp.eq.s32.totalorder %s10, 7
    %p131 = por %p129, %p130
    %p132 = scmp.ne.s32.totalorder %s124, %s127
    %p133 = scmp.eq.s32.totalorder %s10, 0
    %p134 = por %p132, %p133
    %p135 = scmp.ne.s32.totalorder %s124, %s127
    %p136 = scmp.eq.s32.totalorder %s15, 7
    %p137 = por %p135, %p136
    %p138 = scmp.ne.s32.totalorder %s127, %s128
    %p139 = scmp.eq.s32.totalorder %s15, 0
    %p140 = por %p138, %p139
    %p141 = scmp.ne.s32.totalorder %s127, %s128
    %p142 = scmp.eq.s32.totalorder %s16, 7
    %p143 = por %p141, %p142
    %p145 = scmp.ne.s32.totalorder %s128, %s144
    %p146 = scmp.eq.s32.totalorder %s16, 0
    %p147 = por %p145, %p146
    %p148 = scmp.le.s32.totalorder 1, %s10
    %p149 = scmp.lt.s32.totalorder %s10, 9
    %p150 = pnand %p148, %p149
    %p151 = pneg %p150
    // Predicated region
    $region9: #{decoder_layer.17} parent=5 // pred_check
      _
    $region10: #{decoder_layer.17} parent=5 // pred_check_branch
      %153 = sbr.rel (%p150) target = $region12
    $region11: #{decoder_layer.17} parent=5 // pred_region
      %s154 = ssub.s32 %s10, 1
    $region12: #{decoder_layer.17} parent=5 // pred_fallthru
      _
    %p155 = scmp.lt.s32.totalorder %s10, 8
    // Predicated region
    $region13: #{decoder_layer.17} parent=5 // pred_check
      %p156 = pneg %p155
    $region14: #{decoder_layer.17} parent=5 // pred_check_branch
      %158 = sbr.rel (%p156) target = $region16
    $region15: #{decoder_layer.17} parent=5 // pred_region
      // Predicated region
      $region17: #{decoder_layer.17} parent=15 // pred_check
        %p159 = pneg %p30
      $region18: #{decoder_layer.17} parent=15 // pred_check_branch
        %161 = sbr.rel (%p159) target = $region20
      $region19: #{decoder_layer.17} parent=15 // pred_region
        %p162 = scmp.lt.s32.totalorder %s10, 7
        %s163 = scalar_select %p162, %s10, 7
        %s164 = smul.addr %s163, 8
        %s165 = scalar_lea.vmem %s0, %s164
      $region20: #{decoder_layer.17} parent=15 // pred_fallthru
        _
      // Predicated region
      $region21: #{decoder_layer.17} parent=15 // pred_check
        %p166 = pneg %p56
      $region22: #{decoder_layer.17} parent=15 // pred_check_branch
        %168 = sbr.rel (%p166) target = $region24
      $region23: #{decoder_layer.17} parent=15 // pred_region
        %p169 = scmp.lt.s32.totalorder %s10, 7
        %s170 = scalar_select %p169, %s10, 7
        %s171 = smul.addr %s170, 8
        %s172 = scalar_lea.vmem %s1, %s171
      $region24: #{decoder_layer.17} parent=15 // pred_fallthru
        _
      // Predicated region
      $region25: #{decoder_layer.17} parent=15 // pred_check
        %p173 = pneg %p82
      $region26: #{decoder_layer.17} parent=15 // pred_check_branch
        %175 = sbr.rel (%p173) target = $region28
      $region27: #{decoder_layer.17} parent=15 // pred_region
        %p176 = scmp.lt.s32.totalorder %s10, 7
        %s177 = scalar_select %p176, %s10, 7
        %s178 = smul.addr %s177, 8
        %s179 = scalar_lea.vmem %s2, %s178
      $region28: #{decoder_layer.17} parent=15 // pred_fallthru
        _
      // Predicated region
      $region29: #{decoder_layer.17} parent=15 // pred_check
        %p180 = pneg %p108
      $region30: #{decoder_layer.17} parent=15 // pred_check_branch
        %182 = sbr.rel (%p180) target = $region32
      $region31: #{decoder_layer.17} parent=15 // pred_region
        %p183 = scmp.lt.s32.totalorder %s10, 7
        %s184 = scalar_select %p183, %s10, 7
        %s185 = smul.addr %s184, 8
        %s186 = scalar_lea.vmem %s3, %s185
      $region32: #{decoder_layer.17} parent=15 // pred_fallthru
        _
    $region16: #{decoder_layer.17} parent=5 // pred_fallthru
      _
    %p187 = scmp.le.s32.totalorder 1, %s10
    %p188 = scmp.lt.s32.totalorder %s10, 9
    %p189 = pnand %p187, %p188
    %p190 = pneg %p189
    // Predicated region
    $region33: #{decoder_layer.17} parent=5 // pred_check
      _
    $region34: #{decoder_layer.17} parent=5 // pred_check_branch
      %192 = sbr.rel (%p189) target = $region36
    $region35: #{decoder_layer.17} parent=5 // pred_region
      %s193 = ssub.s32 %s10, 1
      %p194 = scmp.lt.s32.totalorder %s15, 7
      %s195 = scalar_select %p194, %s15, 7
      %s196 = smul.addr %s195, 8
      %s197 = scalar_lea.vmem %s0, %s196
      %p198 = pneg %p36
      %p199 = pneg %p33
      %p200 = scmp.lt.s32.totalorder %s15, 7
      %s201 = scalar_select %p200, %s15, 7
      %s202 = smul.addr %s201, 8
      %s203 = scalar_lea.vmem %s1, %s202
      %p204 = pneg %p62
      %p205 = pneg %p59
      %p206 = scmp.lt.s32.totalorder %s15, 7
      %s207 = scalar_select %p206, %s15, 7
      %s208 = smul.addr %s207, 8
      %s209 = scalar_lea.vmem %s2, %s208
      %p210 = pneg %p88
      %p211 = pneg %p85
      %p212 = scmp.lt.s32.totalorder %s15, 7
      %s213 = scalar_select %p212, %s15, 7
      %s214 = smul.addr %s213, 8
      %s215 = scalar_lea.vmem %s3, %s214
      %p216 = pneg %p114
      %p217 = pneg %p111
      %p218 = pneg %p140
      %p219 = pneg %p137
      %p220 = scmp.lt.s32.totalorder %s15, 7
      %s221 = scalar_select %p220, %s15, 7
      %s222 = smul.addr %s221, 8
      %s223 = scalar_lea.vmem %s4, %s222
      %p224 = scmp.lt.s32.totalorder %s15, 7
      %s225 = scalar_select %p224, %s15, 7
      %s226 = smul.addr %s225, 8
      %s227 = scalar_lea.vmem %s0, %s226
      %p228 = scmp.lt.s32.totalorder %s15, 7
      %s229 = scalar_select %p228, %s15, 7
      %s230 = smul.addr %s229, 8
      %s231 = scalar_lea.vmem %s1, %s230
      %p232 = scmp.lt.s32.totalorder %s15, 7
      %s233 = scalar_select %p232, %s15, 7
      %s234 = smul.addr %s233, 8
      %s235 = scalar_lea.vmem %s2, %s234
      %p236 = scmp.lt.s32.totalorder %s15, 7
      %s237 = scalar_select %p236, %s15, 7
      %s238 = smul.addr %s237, 8
      %s239 = scalar_lea.vmem %s3, %s238
      %p240 = scmp.lt.s32.totalorder %s15, 7
      %s241 = scalar_select %p240, %s15, 7
      %s242 = smul.addr %s241, 8
      %s243 = scalar_lea.vmem %s4, %s242
      %v244 = vld [vmem:[%s227] sm:$0xff]
      %v245 = vld [vmem:[%s231] sm:$0xff]
      %v246 = vld [vmem:[%s235] sm:$0xff]
      %vm247 = vcmask 64512
      %v249 = vsel %vm247, %v244, 0
      %v252 = vsel %vm247, %v245, 0
      %254 = vmatpush.xpose.msra.mxu0 0.0
      %255 = vmatpush.xpose.msra.mxu0 0.0
      %256 = vmatpush.xpose.msra.mxu0 0.0
      %257 = vmatpush.xpose.msra.mxu0 0.0
      %258 = vmatpush.xpose.msra.mxu0 0.0
      %259 = vmatpush.xpose.msra.mxu0 0.0
      %260 = vmatpush.xpose.msra.mxu0 0.0
      %261 = vmatpush.xpose.msra.mxu0 0.0
      %262 = vmatpush.xpose.msra.mxu0 0.0
      %263 = vmatpush.xpose.msra.mxu0 0.0
      %264 = vmatpush.xpose.msra.mxu0 0.0
      %265 = vmatpush.xpose.msra.mxu0 0.0
      %266 = vmatpush.xpose.msra.mxu0 0.0
      %267 = vmatpush.xpose.msra.mxu0 0.0
      %268 = vmatpush.xpose.msra.mxu0 0.0
      %269 = vmatpush.xpose.msra.mxu0 %v252
      %270 = vmatmul.f32.gmra.mxu0 %v249
      %v271 = vpop.f32.mrf.mxu0
      %v272 = vadd.f32 0.0, %v271
      %273 = vdwg.mxu0
      %v274 = vmul.f32 %v272, 0.35355338
      %v275 = vld [vmem:[%s239] sm:$0xff]
      %v276 = vadd.f32 %v274, %v275
      %v277 = vsel %vm247, %v276, -inf
      %278 = vmax.xlane.f32.xlu0 %v277
      %v279 = vpop.xlane.xlu0 %278
      %v280 = vsub.f32 %v276, %v279
      %v281 = vmul.f32 %v280, 1.442695
      %v282 = vpow.pop %v281
      %v283 = vsel %vm247, %v282, 0.0
      %284 = vadd.xlane.f32.xlu0 %v283
      %v285 = vpop.xlane.xlu0 %284
      %v286 = vrcp.pop %v285
      %v287 = vmul.f32 %v285, %v286
      %v288 = vsub.f32 1.0, %v287
      %v289 = vmul.f32 %v286, %v288
      %v290 = vadd.f32 %v286, %v289
      %vm291 = vweird.f32 %v285
      %vm292 = vweird.f32 %v286
      %vm293 = vmor %vm291, %vm292
      %v294 = vsel %vm293, %v286, %v290
      %v295 = vand.u32 2147483647, %v285
      %vm296 = vcmp.eq.f32.partialorder %v295, 8.507059e+37
      %v297 = vand.u32 %v285, 2147483648
      %v298 = vor.u32 1.1754944e-38, %v297
      %v299 = vsel %vm296, %v298, %v294
      %v300 = vmul.f32 %v282, %v299
      %v302 = vsel %vm247, %v300, 0
      %304 = vmatpush.msra.mxu0 0.0
      %305 = vmatpush.msra.mxu0 0.0
      %306 = vmatpush.msra.mxu0 0.0
      %307 = vmatpush.msra.mxu0 0.0
      %308 = vmatpush.msra.mxu0 0.0
      %309 = vmatpush.msra.mxu0 0.0
      %310 = vmatpush.msra.mxu0 0.0
      %311 = vmatpush.msra.mxu0 0.0
      %312 = vmatpush.msra.mxu0 0.0
      %313 = vmatpush.msra.mxu0 0.0
      %314 = vmatpush.msra.mxu0 0.0
      %315 = vmatpush.msra.mxu0 0.0
      %316 = vmatpush.msra.mxu0 0.0
      %317 = vmatpush.msra.mxu0 0.0
      %318 = vmatpush.msra.mxu0 0.0
      %319 = vmatpush.msra.mxu0 %v246
      %320 = vmatmul.f32.gmra.mxu0 %v302
      %v321 = vpop.f32.mrf.mxu0
      %v322 = vadd.f32 0.0, %v321
      %323 = vdwg.mxu0
      %324 = vst.msk [vmem:[%s243] sm:$0xff] %vm247, %v322
      %p325 = scmp.lt.s32.totalorder %s15, 7
      %s326 = scalar_select %p325, %s15, 7
      %s327 = smul.addr %s326, 8
      %s328 = scalar_lea.vmem %s4, %s327
      // Predicated region
      $region37: #{decoder_layer.17} parent=35 // pred_check
        %p329 = pneg %p137
      $region38: #{decoder_layer.17} parent=35 // pred_check_branch
        %331 = sbr.rel (%p329) target = $region40
      $region39: #{decoder_layer.17} parent=35 // pred_region
        _
      $region40: #{decoder_layer.17} parent=35 // pred_fallthru
        _
    $region36: #{decoder_layer.17} parent=5 // pred_fallthru
      _
    %p332 = scmp.le.s32.totalorder 2, %s10
    // Predicated region
    $region41: #{decoder_layer.17} parent=5 // pred_check
      %p333 = pneg %p332
    $region42: #{decoder_layer.17} parent=5 // pred_check_branch
      %335 = sbr.rel (%p333) target = $region44
    $region43: #{decoder_layer.17} parent=5 // pred_region
      %s336 = ssub.s32 %s10, 2
      // Predicated region
      $region45: #{decoder_layer.17} parent=43 // pred_check
        %p337 = pneg %p143
      $region46: #{decoder_layer.17} parent=43 // pred_check_branch
        %339 = sbr.rel (%p337) target = $region48
      $region47: #{decoder_layer.17} parent=43 // pred_region
        %p340 = scmp.lt.s32.totalorder %s16, 7
        %s341 = scalar_select %p340, %s16, 7
        %s342 = smul.addr %s341, 8
        %s343 = scalar_lea.vmem %s4, %s342
      $region48: #{decoder_layer.17} parent=43 // pred_fallthru
        _
    $region44: #{decoder_layer.17} parent=5 // pred_fallthru
      _
  $region6: #{decoder_layer.17} parent=0 // loop_footer
    %s14 = sadd.s32 1, %s10
  $region7: #{decoder_layer.17} parent=0 // loop_footer_branch
    %9 = sbr.rel target = $region3
  $region8: #{decoder_layer.17} parent=0 // loop_exit
    _

// kernel: decoder_layer.14
$region0: #{decoder_layer.14}
  #allocation0 [shape = 'u32[]', space=smem, size = 0x4, offset = 0x4, fixed_abs, tag = 'smem constant byte address 0x4 - core index']
  #allocation1 [shape = 'u32[72,128]{1,0:T(1,128)}', space=vmem, size = 0x9000, scoped, tag = 'internal scratch']
  %s0 = inlined_call_operand.vmem [shape: f32[16,128], index: 0, kind: input, shape index: {}]
  %s1 = inlined_call_operand.vmem [shape: f32[128,128], index: 1, kind: input, shape index: {}]
  %s2 = inlined_call_operand.vmem [shape: f32[1,128], index: 2, kind: input, shape index: {}]
  %s3 = inlined_call_operand.vmem [shape: f32[16,128], index: 3, kind: output, shape index: {}]
  %s4 = sld [smem:[#allocation0]]
  $region22: #{decoder_layer.14} parent=0
    _
  %s6 = ssub.s32 1, %s4
  %s7 = scalar_select 0, %s6, %s4
  // Predicated region
  $region2: #{decoder_layer.14} parent=0 // pred_check
    _
  $region3: #{decoder_layer.14} parent=0 // pred_check_branch
    %9 = sbr.rel (0) target = $region5
  $region4: #{decoder_layer.14} parent=0 // pred_region
    _
  $region5: #{decoder_layer.14} parent=0 // pred_fallthru
    _
  // Predicated region
  $region6: #{decoder_layer.14} parent=0 // pred_check
    _
  $region7: #{decoder_layer.14} parent=0 // pred_check_branch
    %11 = sbr.rel (0) target = $region9
  $region8: #{decoder_layer.14} parent=0 // pred_region
    _
  $region9: #{decoder_layer.14} parent=0 // pred_fallthru
    _
  // Predicated region
  $region10: #{decoder_layer.14} parent=0 // pred_check
    _
  $region11: #{decoder_layer.14} parent=0 // pred_check_branch
    %13 = sbr.rel (0) target = $region13
  $region12: #{decoder_layer.14} parent=0 // pred_region
    _
  $region13: #{decoder_layer.14} parent=0 // pred_fallthru
    _
  %v14 = vld [vmem:[%s0] sm:$0xff]
  %v15 = vld [vmem:[%s0 + $0x8] sm:$0xff]
  %v16 = vld [vmem:[%s1] sm:$0xff]
  %v17 = vld [vmem:[%s1 + $0x8] sm:$0xff]
  %v18 = vld [vmem:[%s1 + $0x10] sm:$0xff]
  %v19 = vld [vmem:[%s1 + $0x18] sm:$0xff]
  %v20 = vld [vmem:[%s1 + $0x20] sm:$0xff]
  %v21 = vld [vmem:[%s1 + $0x28] sm:$0xff]
  %v22 = vld [vmem:[%s1 + $0x30] sm:$0xff]
  %v23 = vld [vmem:[%s1 + $0x38] sm:$0xff]
  %v24 = vld [vmem:[%s1 + $0x40] sm:$0xff]
  %v25 = vld [vmem:[%s1 + $0x48] sm:$0xff]
  %v26 = vld [vmem:[%s1 + $0x50] sm:$0xff]
  %v27 = vld [vmem:[%s1 + $0x58] sm:$0xff]
  %v28 = vld [vmem:[%s1 + $0x60] sm:$0xff]
  %v29 = vld [vmem:[%s1 + $0x68] sm:$0xff]
  %v30 = vld [vmem:[%s1 + $0x70] sm:$0xff]
  %v31 = vld [vmem:[%s1 + $0x78] sm:$0xff]
  %v32 = vld [vmem:[%s2] sm:$0x1]
  %v34 = vperm.slane %v32, 0
  %36 = vmatpush.msra.mxu0 %v31
  %37 = vmatpush.msra.mxu0 %v30
  %38 = vmatpush.msra.mxu0 %v29
  %39 = vmatpush.msra.mxu0 %v28
  %40 = vmatpush.msra.mxu0 %v27
  %41 = vmatpush.msra.mxu0 %v26
  %42 = vmatpush.msra.mxu0 %v25
  %43 = vmatpush.msra.mxu0 %v24
  %44 = vmatpush.msra.mxu0 %v23
  %45 = vmatpush.msra.mxu0 %v22
  %46 = vmatpush.msra.mxu0 %v21
  %47 = vmatpush.msra.mxu0 %v20
  %48 = vmatpush.msra.mxu0 %v19
  %49 = vmatpush.msra.mxu0 %v18
  %50 = vmatpush.msra.mxu0 %v17
  %51 = vmatpush.msra.mxu0 %v16
  %52 = vmatmul.f32.gmra.mxu0 %v14
  %v53 = vpop.f32.mrf.mxu0
  %v54 = vadd.f32 %v34, %v53
  %55 = vmatmul.f32.gmra.mxu0 %v15
  %v56 = vpop.f32.mrf.mxu0
  %v57 = vadd.f32 %v34, %v56
  %58 = vdwg.mxu0
  %59 = vst [vmem:[%s3] sm:$0xff] %v54
  %60 = vst [vmem:[%s3 + $0x8] sm:$0xff] %v57
  // Predicated region
  $region14: #{decoder_layer.14} parent=0 // pred_check
    _
  $region15: #{decoder_layer.14} parent=0 // pred_check_branch
    %62 = sbr.rel (0) target = $region17
  $region16: #{decoder_layer.14} parent=0 // pred_region
    _
  $region17: #{decoder_layer.14} parent=0 // pred_fallthru
    _
  // Predicated region
  $region18: #{decoder_layer.14} parent=0 // pred_check
    _
  $region19: #{decoder_layer.14} parent=0 // pred_check_branch
    %64 = sbr.rel (0) target = $region21
  $region20: #{decoder_layer.14} parent=0 // pred_region
    _
  $region21: #{decoder_layer.14} parent=0 // pred_fallthru
    _

// kernel: decoder_layer.19
$region0: #{decoder_layer.19}
  #allocation0 [shape = 'u32[]', space=smem, size = 0x4, offset = 0x4, fixed_abs, tag = 'smem constant byte address 0x4 - core index']
  #allocation1 [shape = 'u32[72,128]{1,0:T(1,128)}', space=vmem, size = 0x9000, scoped, tag = 'internal scratch']
  %s0 = inlined_call_operand.vmem [shape: f32[16,128], index: 0, kind: input, shape index: {}, may-alias: {0,1}]
  %s1 = inlined_call_operand.vmem [shape: f32[16,128], index: 1, kind: input, shape index: {}, may-alias: {0,1}]
  %s2 = inlined_call_operand.vmem [shape: f32[1,128], index: 2, kind: input, shape index: {}]
  %s3 = inlined_call_operand.vmem [shape: f32[1,128], index: 3, kind: input, shape index: {}]
  %s4 = inlined_call_operand.vmem [shape: f32[16,128], index: 4, kind: output, shape index: {}]
  %s5 = sld [smem:[#allocation0]]
  $region26: #{decoder_layer.19} parent=0
    _
  %s7 = ssub.s32 1, %s5
  %s8 = scalar_select 0, %s7, %s5
  // Predicated region
  $region2: #{decoder_layer.19} parent=0 // pred_check
    _
  $region3: #{decoder_layer.19} parent=0 // pred_check_branch
    %10 = sbr.rel (0) target = $region5
  $region4: #{decoder_layer.19} parent=0 // pred_region
    _
  $region5: #{decoder_layer.19} parent=0 // pred_fallthru
    _
  // Predicated region
  $region6: #{decoder_layer.19} parent=0 // pred_check
    _
  $region7: #{decoder_layer.19} parent=0 // pred_check_branch
    %12 = sbr.rel (0) target = $region9
  $region8: #{decoder_layer.19} parent=0 // pred_region
    _
  $region9: #{decoder_layer.19} parent=0 // pred_fallthru
    _
  // Predicated region
  $region10: #{decoder_layer.19} parent=0 // pred_check
    _
  $region11: #{decoder_layer.19} parent=0 // pred_check_branch
    %14 = sbr.rel (0) target = $region13
  $region12: #{decoder_layer.19} parent=0 // pred_region
    _
  $region13: #{decoder_layer.19} parent=0 // pred_fallthru
    _
  // Predicated region
  $region14: #{decoder_layer.19} parent=0 // pred_check
    _
  $region15: #{decoder_layer.19} parent=0 // pred_check_branch
    %16 = sbr.rel (0) target = $region17
  $region16: #{decoder_layer.19} parent=0 // pred_region
    _
  $region17: #{decoder_layer.19} parent=0 // pred_fallthru
    _
  %v17 = vld [vmem:[%s0] sm:$0xff]
  %v18 = vld [vmem:[%s0 + $0x8] sm:$0xff]
  %v19 = vld [vmem:[%s1] sm:$0xff]
  %v20 = vld [vmem:[%s1 + $0x8] sm:$0xff]
  %v21 = vadd.f32 %v17, %v19
  %v22 = vadd.f32 %v18, %v20
  %23 = vadd.xlane.f32.xlu0 %v21
  %v24 = vpop.xlane.xlu0 %23
  %25 = vadd.xlane.f32.xlu0 %v22
  %v26 = vpop.xlane.xlu0 %25
  %v27 = vmul.f32 %v24, 0.03125
  %v28 = vmul.f32 %v26, 0.03125
  %v29 = vmul.f32 %v21, %v21
  %v30 = vmul.f32 %v22, %v22
  %31 = vadd.xlane.f32.xlu0 %v29
  %v32 = vpop.xlane.xlu0 %31
  %33 = vadd.xlane.f32.xlu0 %v30
  %v34 = vpop.xlane.xlu0 %33
  %v35 = vmul.f32 %v32, 0.03125
  %v36 = vmul.f32 %v34, 0.03125
  %v37 = vmul.f32 %v27, %v27
  %v38 = vmul.f32 %v28, %v28
  %v39 = vsub.f32 %v35, %v37
  %v40 = vsub.f32 %v36, %v38
  %v41 = vmax.f32 %v39, 0.0
  %v42 = vmax.f32 %v40, 0.0
  %v43 = vadd.f32 %v41, 1e-05
  %v44 = vadd.f32 %v42, 1e-05
  %v45 = vrsqrt.pop %v43
  %v46 = vmul.f32 %v45, %v43
  %v47 = vmul.f32 %v46, %v45
  %v48 = vmul.f32 0.5, %v47
  %v49 = vsub.f32 1.5, %v48
  %v50 = vmul.f32 %v45, %v49
  %vm51 = vweird.f32 %v43
  %vm52 = vweird.f32 %v45
  %vm53 = vmor %vm51, %vm52
  %v54 = vsel %vm53, %v45, %v50
  %v55 = vrsqrt.pop %v44
  %v56 = vmul.f32 %v55, %v44
  %v57 = vmul.f32 %v56, %v55
  %v58 = vmul.f32 0.5, %v57
  %v59 = vsub.f32 1.5, %v58
  %v60 = vmul.f32 %v55, %v59
  %vm61 = vweird.f32 %v44
  %vm62 = vweird.f32 %v55
  %vm63 = vmor %vm61, %vm62
  %v64 = vsel %vm63, %v55, %v60
  %v65 = vsub.f32 %v21, %v27
  %v66 = vsub.f32 %v22, %v28
  %v67 = vmul.f32 %v65, %v54
  %v68 = vmul.f32 %v66, %v64
  %v69 = vld [vmem:[%s2] sm:$0x1]
  %v71 = vperm.slane %v69, 0
  %v73 = vmul.f32 %v67, %v71
  %v74 = vmul.f32 %v68, %v71
  %v75 = vld [vmem:[%s3] sm:$0x1]
  %v77 = vperm.slane %v75, 0
  %v79 = vadd.f32 %v73, %v77
  %v80 = vadd.f32 %v74, %v77
  %81 = vst [vmem:[%s4] sm:$0xff] %v79
  %82 = vst [vmem:[%s4 + $0x8] sm:$0xff] %v80
  // Predicated region
  $region18: #{decoder_layer.19} parent=0 // pred_check
    _
  $region19: #{decoder_layer.19} parent=0 // pred_check_branch
    %84 = sbr.rel (0) target = $region21
  $region20: #{decoder_layer.19} parent=0 // pred_region
    _
  $region21: #{decoder_layer.19} parent=0 // pred_fallthru
    _
  // Predicated region
  $region22: #{decoder_layer.19} parent=0 // pred_check
    _
  $region23: #{decoder_layer.19} parent=0 // pred_check_branch
    %86 = sbr.rel (0) target = $region25
  $region24: #{decoder_layer.19} parent=0 // pred_region
    _
  $region25: #{decoder_layer.19} parent=0 // pred_fallthru
    _

// kernel: decoder_layer.26
$region0: #{decoder_layer.26}
  #allocation0 [shape = 'u32[]', space=smem, size = 0x4, offset = 0x4, fixed_abs, tag = 'smem constant byte address 0x4 - core index']
  #allocation1 [shape = 'u32[72,128]{1,0:T(1,128)}', space=vmem, size = 0x9000, scoped, tag = 'internal scratch']
  #allocation2 [shape = 'f32[16,128]{1,0:T(8,128)}', space=vmem, size = 0x2000, scoped, tag = 'scratch operand']
  %s0 = inlined_call_operand.vmem [shape: f32[16,128], index: 0, kind: input, shape index: {}]
  %s1 = inlined_call_operand.vmem [shape: f32[128,128], index: 1, kind: input, shape index: {}]
  %s2 = inlined_call_operand.vmem [shape: f32[1,128], index: 2, kind: input, shape index: {}]
  %s3 = inlined_call_operand.vmem [shape: f32[128,128], index: 3, kind: input, shape index: {}]
  %s4 = inlined_call_operand.vmem [shape: f32[1,128], index: 4, kind: input, shape index: {}]
  %s5 = inlined_call_operand.vmem [shape: f32[16,128], index: 5, kind: output, shape index: {}]
  %s6 = sld [smem:[#allocation0]]
  $region38: #{decoder_layer.26} parent=0
    _
  %s8 = ssub.s32 1, %s6
  %s9 = scalar_select 0, %s8, %s6
  // Predicated region
  $region2: #{decoder_layer.26} parent=0 // pred_check
    _
  $region3: #{decoder_layer.26} parent=0 // pred_check_branch
    %11 = sbr.rel (0) target = $region5
  $region4: #{decoder_layer.26} parent=0 // pred_region
    _
  $region5: #{decoder_layer.26} parent=0 // pred_fallthru
    _
  // Predicated region
  $region6: #{decoder_layer.26} parent=0 // pred_check
    _
  $region7: #{decoder_layer.26} parent=0 // pred_check_branch
    %13 = sbr.rel (0) target = $region9
  $region8: #{decoder_layer.26} parent=0 // pred_region
    _
  $region9: #{decoder_layer.26} parent=0 // pred_fallthru
    _
  // Predicated region
  $region10: #{decoder_layer.26} parent=0 // pred_check
    _
  $region11: #{decoder_layer.26} parent=0 // pred_check_branch
    %15 = sbr.rel (0) target = $region13
  $region12: #{decoder_layer.26} parent=0 // pred_region
    _
  $region13: #{decoder_layer.26} parent=0 // pred_fallthru
    _
  // Predicated region
  $region14: #{decoder_layer.26} parent=0 // pred_check
    _
  $region15: #{decoder_layer.26} parent=0 // pred_check_branch
    %17 = sbr.rel (0) target = $region17
  $region16: #{decoder_layer.26} parent=0 // pred_region
    _
  $region17: #{decoder_layer.26} parent=0 // pred_fallthru
    _
  // Predicated region
  $region18: #{decoder_layer.26} parent=0 // pred_check
    _
  $region19: #{decoder_layer.26} parent=0 // pred_check_branch
    %19 = sbr.rel (0) target = $region21
  $region20: #{decoder_layer.26} parent=0 // pred_region
    _
  $region21: #{decoder_layer.26} parent=0 // pred_fallthru
    _
  %p20 = scmp.eq.s32.totalorder 0, 0
  // Predicated region
  $region22: #{decoder_layer.26} parent=0 // pred_check
    %p21 = pneg %p20
  $region23: #{decoder_layer.26} parent=0 // pred_check_branch
    %23 = sbr.rel (%p21) target = $region25
  $region24: #{decoder_layer.26} parent=0 // pred_region
    %24 = vst [vmem:[#allocation2] sm:$0xff] 0.0
    %25 = vst [vmem:[#allocation2 + $0x8] sm:$0xff] 0.0
  $region25: #{decoder_layer.26} parent=0 // pred_fallthru
    _
  %v26 = vld [vmem:[%s0] sm:$0xff]
  %v27 = vld [vmem:[%s0 + $0x8] sm:$0xff]
  %v28 = vld [vmem:[%s1] sm:$0xff]
  %v29 = vld [vmem:[%s1 + $0x8] sm:$0xff]
  %v30 = vld [vmem:[%s1 + $0x10] sm:$0xff]
  %v31 = vld [vmem:[%s1 + $0x18] sm:$0xff]
  %v32 = vld [vmem:[%s1 + $0x20] sm:$0xff]
  %v33 = vld [vmem:[%s1 + $0x28] sm:$0xff]
  %v34 = vld [vmem:[%s1 + $0x30] sm:$0xff]
  %v35 = vld [vmem:[%s1 + $0x38] sm:$0xff]
  %v36 = vld [vmem:[%s1 + $0x40] sm:$0xff]
  %v37 = vld [vmem:[%s1 + $0x48] sm:$0xff]
  %v38 = vld [vmem:[%s1 + $0x50] sm:$0xff]
  %v39 = vld [vmem:[%s1 + $0x58] sm:$0xff]
  %v40 = vld [vmem:[%s1 + $0x60] sm:$0xff]
  %v41 = vld [vmem:[%s1 + $0x68] sm:$0xff]
  %v42 = vld [vmem:[%s1 + $0x70] sm:$0xff]
  %v43 = vld [vmem:[%s1 + $0x78] sm:$0xff]
  %v44 = vld [vmem:[%s2] sm:$0x1]
  %v46 = vperm.slane %v44, 0
  %48 = vmatpush.msra.mxu0 %v43
  %49 = vmatpush.msra.mxu0 %v42
  %50 = vmatpush.msra.mxu0 %v41
  %51 = vmatpush.msra.mxu0 %v40
  %52 = vmatpush.msra.mxu0 %v39
  %53 = vmatpush.msra.mxu0 %v38
  %54 = vmatpush.msra.mxu0 %v37
  %55 = vmatpush.msra.mxu0 %v36
  %56 = vmatpush.msra.mxu0 %v35
  %57 = vmatpush.msra.mxu0 %v34
  %58 = vmatpush.msra.mxu0 %v33
  %59 = vmatpush.msra.mxu0 %v32
  %60 = vmatpush.msra.mxu0 %v31
  %61 = vmatpush.msra.mxu0 %v30
  %62 = vmatpush.msra.mxu0 %v29
  %63 = vmatpush.msra.mxu0 %v28
  %64 = vmatmul.f32.gmra.mxu0 %v26
  %v65 = vpop.f32.mrf.mxu0
  %v66 = vadd.f32 %v46, %v65
  %67 = vmatmul.f32.gmra.mxu0 %v27
  %v68 = vpop.f32.mrf.mxu0
  %v69 = vadd.f32 %v46, %v68
  %70 = vdwg.mxu0
  %v71 = vmax.f32 %v66, 0.0
  %v72 = vmax.f32 %v69, 0.0
  %v73 = vld [vmem:[#allocation2] sm:$0xff]
  %v74 = vld [vmem:[#allocation2 + $0x8] sm:$0xff]
  %v75 = vld [vmem:[%s3] sm:$0xff]
  %v76 = vld [vmem:[%s3 + $0x8] sm:$0xff]
  %v77 = vld [vmem:[%s3 + $0x10] sm:$0xff]
  %v78 = vld [vmem:[%s3 + $0x18] sm:$0xff]
  %v79 = vld [vmem:[%s3 + $0x20] sm:$0xff]
  %v80 = vld [vmem:[%s3 + $0x28] sm:$0xff]
  %v81 = vld [vmem:[%s3 + $0x30] sm:$0xff]
  %v82 = vld [vmem:[%s3 + $0x38] sm:$0xff]
  %v83 = vld [vmem:[%s3 + $0x40] sm:$0xff]
  %v84 = vld [vmem:[%s3 + $0x48] sm:$0xff]
  %v85 = vld [vmem:[%s3 + $0x50] sm:$0xff]
  %v86 = vld [vmem:[%s3 + $0x58] sm:$0xff]
  %v87 = vld [vmem:[%s3 + $0x60] sm:$0xff]
  %v88 = vld [vmem:[%s3 + $0x68] sm:$0xff]
  %v89 = vld [vmem:[%s3 + $0x70] sm:$0xff]
  %v90 = vld [vmem:[%s3 + $0x78] sm:$0xff]
  %91 = vmatpush.msra.mxu0 %v90
  %92 = vmatpush.msra.mxu0 %v89
  %93 = vmatpush.msra.mxu0 %v88
  %94 = vmatpush.msra.mxu0 %v87
  %95 = vmatpush.msra.mxu0 %v86
  %96 = vmatpush.msra.mxu0 %v85
  %97 = vmatpush.msra.mxu0 %v84
  %98 = vmatpush.msra.mxu0 %v83
  %99 = vmatpush.msra.mxu0 %v82
  %100 = vmatpush.msra.mxu0 %v81
  %101 = vmatpush.msra.mxu0 %v80
  %102 = vmatpush.msra.mxu0 %v79
  %103 = vmatpush.msra.mxu0 %v78
  %104 = vmatpush.msra.mxu0 %v77
  %105 = vmatpush.msra.mxu0 %v76
  %106 = vmatpush.msra.mxu0 %v75
  %107 = vmatmul.f32.gmra.mxu0 %v71
  %v108 = vpop.f32.mrf.mxu0
  %v109 = vadd.f32 0.0, %v108
  %110 = vmatmul.f32.gmra.mxu0 %v72
  %v111 = vpop.f32.mrf.mxu0
  %v112 = vadd.f32 0.0, %v111
  %113 = vdwg.mxu0
  %v114 = vadd.f32 %v73, %v109
  %v115 = vadd.f32 %v74, %v112
  %116 = vst [vmem:[#allocation2] sm:$0xff] %v114
  %117 = vst [vmem:[#allocation2 + $0x8] sm:$0xff] %v115
  // Predicated region
  $region26: #{decoder_layer.26} parent=0 // pred_check
    %p118 = pneg %p20
  $region27: #{decoder_layer.26} parent=0 // pred_check_branch
    %120 = sbr.rel (%p118) target = $region29
  $region28: #{decoder_layer.26} parent=0 // pred_region
    %v121 = vld [vmem:[#allocation2] sm:$0xff]
    %v122 = vld [vmem:[#allocation2 + $0x8] sm:$0xff]
    %v123 = vld [vmem:[%s4] sm:$0x1]
    %v125 = vperm.slane %v123, 0
    %v127 = vadd.f32 %v121, %v125
    %v128 = vadd.f32 %v122, %v125
    %129 = vst [vmem:[%s5] sm:$0xff] %v127
    %130 = vst [vmem:[%s5 + $0x8] sm:$0xff] %v128
  $region29: #{decoder_layer.26} parent=0 // pred_fallthru
    _
  // Predicated region
  $region30: #{decoder_layer.26} parent=0 // pred_check
    _
  $region31: #{decoder_layer.26} parent=0 // pred_check_branch
    %132 = sbr.rel (0) target = $region33
  $region32: #{decoder_layer.26} parent=0 // pred_region
    _
  $region33: #{decoder_layer.26} parent=0 // pred_fallthru
    _
  // Predicated region
  $region34: #{decoder_layer.26} parent=0 // pred_check
    _
  $region35: #{decoder_layer.26} parent=0 // pred_check_branch
    %134 = sbr.rel (0) target = $region37
  $region36: #{decoder_layer.26} parent=0 // pred_region
    _
  $region37: #{decoder_layer.26} parent=0 // pred_fallthru
    _

</llo_original>
